<compile_context>
chip_gen: v7x
topology: tpu7x:2x2x1
jax: 0.10.0
libtpu: 0.0.40
codegen_flags: <defaults>
</compile_context>

<pallas_src>
import functools

import jax
import jax.numpy as jnp
from jax.experimental import pallas as pl
from jax.experimental.pallas import tpu as pltpu

LEAKY_SLOPE = 0.2
BN_EPS = 1e-5
_HALO = 128                      # lane width of the halo blocks (min lane granule)
_VMEM_LIMIT = 32 * 1024 * 1024   # fits v5e/v6e/v7x scoped VMEM at this design point; re-derive
                                 # (cap ~48 MiB on v7x's 64 MiB) before scaling tile_l/channels.


def _cdiv(a, b):
    return (a + b - 1) // b


def _round_up(a, b):
    return _cdiv(a, b) * b


def _conv_tile(xa_ref, lh_ref, rh_ref, w_ref, *, lt, k_taps, pad, tile_l, n_lt, cdt):
    """Conv1d tile -> (Cout, tile_l) f32 via K per-tap MXU matmuls.

    xa_ref: (1, Cin, tile_l)  current tile
    lh_ref: (1, Cin, 128)     the 128 columns just left of the tile (index clamped at lt == 0)
    rh_ref: (1, Cin, 128)     the 128 columns just right of the tile (clamped at lt == n_lt-1)
    w_ref : (K, Cout, Cin)    taps-major weight
    The +/-d lane shifts use pltpu.roll (XLU); the <= pad wrapped boundary columns per tap are
    fixed from the halo blocks (or zeroed at the sequence edges == the conv zero padding).
    """
    xa = xa_ref[0].astype(cdt)                                       # (Cin, tile_l)
    lane = jax.lax.broadcasted_iota(jnp.int32, (1, tile_l), 1)
    is_first = lt == 0
    is_last = lt == n_lt - 1

    acc = None
    for k in range(k_taps):
        d = k - pad                                                  # input offset of this tap
        if d == 0:
            xs = xa
        elif d < 0:
            xs = pltpu.roll(xa, shift=-d, axis=1)                    # xs[l] = xa[l+d] for l >= -d
            lh = lh_ref[0].astype(cdt)                               # (Cin, 128)
            for l in range(-d):                                      # wrapped columns on the left
                col = jnp.where(is_first, 0.0, lh[:, _HALO + l + d:_HALO + l + d + 1])
                xs = jnp.where(lane == l, col, xs)
        else:
            xs = pltpu.roll(xa, shift=tile_l - d, axis=1)            # xs[l] = xa[l+d] for l < tl-d
            rh = rh_ref[0].astype(cdt)                               # (Cin, 128)
            for j in range(d):                                       # wrapped columns on the right
                col = jnp.where(is_last, 0.0, rh[:, j:j + 1])
                xs = jnp.where(lane == tile_l - d + j, col, xs)
        t = jnp.dot(w_ref[k].astype(cdt), xs, preferred_element_type=jnp.float32)
        acc = t if acc is None else acc + t
    return acc                                                       # (Cout, tile_l) f32


def _stats_kernel(xa_ref, lh_ref, rh_ref, w_ref, c_ref, s1_ref, s2_ref, *,
                  k_taps, pad, tile_l, n_lt, length, cdt):
    """Phase 1: per-sample shifted (centered) conv statistics.

    c_ref : per-(n, channel) shift = mean of the first tile (written at lt == 0)
    s1_ref: sum(conv - c), s2_ref: sum((conv - c)^2) over the valid columns of sample n.
    The per-sample shift avoids the E[x^2] - mean^2 cancellation of raw-moment accumulation.
    """
    lt = pl.program_id(1)
    conv = _conv_tile(xa_ref, lh_ref, rh_ref, w_ref, lt=lt, k_taps=k_taps, pad=pad,
                      tile_l=tile_l, n_lt=n_lt, cdt=cdt)             # (Cout, tile_l) f32

    ragged = length % tile_l != 0          # masking code only exists when the tail is padded
    if ragged:
        col = lt * tile_l + jax.lax.broadcasted_iota(jnp.int32, (1, tile_l), 1)
        valid = col < length

    @pl.when(lt == 0)
    def _():
        if ragged:
            n0 = min(tile_l, length)
            m0 = jnp.sum(jnp.where(valid, conv, 0.0), axis=-1, keepdims=True) / n0
        else:
            m0 = jnp.sum(conv, axis=-1, keepdims=True) / tile_l
        c_ref[0] = m0
        s1_ref[...] = jnp.zeros(s1_ref.shape, s1_ref.dtype)
        s2_ref[...] = jnp.zeros(s2_ref.shape, s2_ref.dtype)

    dev = conv - c_ref[0]
    if ragged:
        dev = jnp.where(valid, dev, 0.0)
    s1_ref[0] += jnp.sum(dev, axis=-1, keepdims=True)
    s2_ref[0] += jnp.sum(dev * dev, axis=-1, keepdims=True)


def _apply_kernel(xa_ref, lh_ref, rh_ref, w_ref, shift_ref, out_ref, *,
                  k_taps, pad, tile_l, n_lt, cdt):
    """Phase 2: conv (BN scale pre-folded into W) + shift + LeakyReLU, lane-dense store."""
    lt = pl.program_id(1)
    conv = _conv_tile(xa_ref, lh_ref, rh_ref, w_ref, lt=lt, k_taps=k_taps, pad=pad,
                      tile_l=tile_l, n_lt=n_lt, cdt=cdt)             # (Cout, tile_l) f32
    y = conv + shift_ref[...]                                        # (Cout, 1) broadcast
    y = jnp.where(y > 0, y, LEAKY_SLOPE * y)
    ob = out_ref.shape[2]
    if ob != tile_l:                                                 # only when L < one tile
        y = y[:, :ob]
    out_ref[0] = y.astype(out_ref.dtype)


def conv_block(x, weight, bias, gamma, beta, *, padding=1, eps=BN_EPS,
               tile_l=2048, compute_dtype=None, batch_norm=True):
    """Fused Conv1d(k, s=1, 'same') + BatchNorm1d (training batch stats) + LeakyReLU(0.2).

    x: (N, Cin, L).  Returns (N, Cout, L) in x.dtype.
    With batch_norm=True the conv bias is unused (training-mode BN cancels it exactly);
    with batch_norm=False the bias is applied as the post-matmul shift.
    compute_dtype=jnp.bfloat16 halves the x DMA width (cast happens in the wrapper); the conv
    then runs in bf16 while accumulation / statistics / output stay f32 (stats shift slightly).
    """
    N, Cin, L = x.shape
    Cout, Cin_w, K = weight.shape
    assert Cin_w == Cin
    assert K % 2 == 1 and padding == (K - 1) // 2, \
        "only stride=1, odd kernel, 'same' padding (the ConvBlock defaults)"
    # TODO(synk): stride != 1 / non-'same' padding Conv1d configs are not implemented.
    # TODO(synk): for Cin >= Cout, materializing the bf16 conv output in phase 1 instead of
    # recomputing it in phase 2 would use less HBM bandwidth (shape-dependent switch).

    cdt = compute_dtype or x.dtype

    tl = min(_round_up(tile_l, _HALO), _round_up(L, _HALO))          # lane tile, multiple of 128
    n_lt = _cdiv(L, tl)
    lt_len = n_lt * tl
    m = tl // _HALO
    nb = lt_len // _HALO                                             # number of 128-lane blocks

    x_in = x.astype(cdt) if cdt != x.dtype else x
    if lt_len != L:
        # Only when L is not a multiple of the tile: zero-pad the tail so input blocks are exact.
        x_in = jnp.pad(x_in, ((0, 0), (0, 0), (0, lt_len - L)))

    w_t = jnp.transpose(weight, (2, 0, 1)).astype(jnp.float32)       # (K, Cout, Cin), taps-major

    x_spec = pl.BlockSpec((1, Cin, tl), lambda n, lt: (n, 0, lt))
    lh_spec = pl.BlockSpec((1, Cin, _HALO),
                           lambda n, lt: (n, 0, jnp.maximum(lt * m - 1, 0)))
    rh_spec = pl.BlockSpec((1, Cin, _HALO),
                           lambda n, lt: (n, 0, jnp.minimum((lt + 1) * m, nb - 1)))
    w_spec = pl.BlockSpec((K, Cout, Cin), lambda n, lt: (0, 0, 0))

    if batch_norm:
        # ---- Phase 1: shifted per-sample conv statistics ------------------------------------
        # TODO(synk): on v7x with N == 1 (or odd N) split the lt range into two parallel halves
        # with partial (c, s1, s2) outputs so both TensorCores work during the stats pass.
        stats_spec = pl.BlockSpec((1, Cout, 1), lambda n, lt: (n, 0, 0))   # revisited across lt
        c0, s1, s2 = pl.pallas_call(
            functools.partial(_stats_kernel, k_taps=K, pad=padding, tile_l=tl, n_lt=n_lt,
                              length=L, cdt=cdt),
            grid=(N, n_lt),
            in_specs=[x_spec, lh_spec, rh_spec, w_spec],
            out_specs=(stats_spec, stats_spec, stats_spec),
            out_shape=(jax.ShapeDtypeStruct((N, Cout, 1), jnp.float32),) * 3,
            compiler_params=pltpu.CompilerParams(
                dimension_semantics=("parallel", "arbitrary"),
                vmem_limit_bytes=_VMEM_LIMIT),
        )(x_in, x_in, x_in, w_t.astype(cdt))

        # ---- Combine per-sample centered partials (Chan) and fold BN into (scaled W, shift) --
        c0, s1, s2 = c0[:, :, 0], s1[:, :, 0], s2[:, :, 0]           # (N, Cout)
        lf = jnp.float32(L)
        mean_n = c0 + s1 / lf                                        # per-sample channel means
        m2_n = s2 - s1 * s1 / lf                                     # per-sample sum sq. deviations
        mean = jnp.mean(mean_n, axis=0)                              # (Cout,)
        m2 = jnp.sum(m2_n, axis=0) + lf * jnp.sum((mean_n - mean) ** 2, axis=0)
        var = jnp.maximum(m2, 0.0) / (N * lf)                        # biased, as BN training uses
        scale = gamma.astype(jnp.float32) * jax.lax.rsqrt(var + eps)
        shift = (beta.astype(jnp.float32) - mean * scale).reshape(Cout, 1)
    else:
        scale = jnp.ones((Cout,), jnp.float32)
        shift = bias.astype(jnp.float32).reshape(Cout, 1)

    w_scaled = (w_t * scale[None, :, None]).astype(cdt)              # fold BN scale into the weight

    # ---- Phase 2: conv recompute + shift + LeakyReLU, written straight to (N, Cout, L) -------
    out_tl = tl if L >= tl else L
    out_spec = pl.BlockSpec((1, Cout, out_tl), lambda n, lt: (n, 0, lt))
    vec_spec = pl.BlockSpec((Cout, 1), lambda n, lt: (0, 0))
    out = pl.pallas_call(
        functools.partial(_apply_kernel, k_taps=K, pad=padding, tile_l=tl, n_lt=n_lt, cdt=cdt),
        grid=(N, n_lt),
        in_specs=[x_spec, lh_spec, rh_spec, w_spec, vec_spec],
        out_specs=out_spec,
        out_shape=jax.ShapeDtypeStruct((N, Cout, L), x.dtype),
        compiler_params=pltpu.CompilerParams(
            dimension_semantics=("parallel", "parallel"),
            vmem_limit_bytes=_VMEM_LIMIT),
    )(x_in, x_in, x_in, w_scaled, shift)
    return out


def conv_block_reference(x, weight, bias, gamma, beta, *, padding=1, eps=BN_EPS):
    """Pure-JAX reference (mirrors the PyTorch forward in training mode, bias included)."""
    y = jax.lax.conv_general_dilated(
        x, weight, window_strides=(1,), padding=[(padding, padding)],
        dimension_numbers=("NCH", "OIH", "NCH"),
    ) + bias[None, :, None]
    mean = jnp.mean(y, axis=(0, 2), keepdims=True)
    var = jnp.mean((y - mean) ** 2, axis=(0, 2), keepdims=True)
    yn = (y - mean) * jax.lax.rsqrt(var + eps)
    yn = yn * gamma[None, :, None] + beta[None, :, None]
    return jnp.where(yn > 0, yn, LEAKY_SLOPE * yn)


if __name__ == "__main__":
    # Small shapes consistent with ConvBlock(in_channels=4, out_channels=8)
    N, Cin, Cout, L, K = 2, 4, 8, 16, 3

    key = jax.random.PRNGKey(0)
    kx, kw, kb = jax.random.split(key, 3)

    x = jax.random.normal(kx, (N, Cin, L), dtype=jnp.float32)

    # Deterministic parameter init (PyTorch-style uniform bound for conv).
    bound = 1.0 / jnp.sqrt(jnp.float32(Cin * K))
    weight = jax.random.uniform(kw, (Cout, Cin, K), minval=-bound, maxval=bound,
                                dtype=jnp.float32)
    bias = jax.random.uniform(kb, (Cout,), minval=-bound, maxval=bound,
                              dtype=jnp.float32)
    gamma = jnp.ones((Cout,), jnp.float32)   # BatchNorm default weight
    beta = jnp.zeros((Cout,), jnp.float32)   # BatchNorm default bias

    out = jax.jit(conv_block)(x, weight, bias, gamma, beta)
    out = jax.block_until_ready(out)

    ref = conv_block_reference(x, weight, bias, gamma, beta)
    assert out.shape == (N, Cout, L)
    assert jnp.allclose(out, ref, atol=1e-3, rtol=1e-3), float(jnp.max(jnp.abs(out - ref)))

    print("KERNEL_OK")
</pallas_src>

<mosaic_0001>
module attributes {stable_mosaic.version = 11 : i64} {
  func.func @_stats_kernel(%arg0: i32, %arg1: i32, %arg2: memref<1x4x128xf32, #tpu.memory_space<vmem>>, %arg3: memref<1x4x128xf32, #tpu.memory_space<vmem>>, %arg4: memref<1x4x128xf32, #tpu.memory_space<vmem>>, %arg5: memref<3x8x4xf32, #tpu.memory_space<vmem>>, %arg6: memref<1x8x1xf32, #tpu.memory_space<vmem>>, %arg7: memref<1x8x1xf32, #tpu.memory_space<vmem>>, %arg8: memref<1x8x1xf32, #tpu.memory_space<vmem>>) attributes {dimension_semantics = [#tpu.dimension_semantics<parallel>, #tpu.dimension_semantics<arbitrary>], iteration_bounds = array<i64: 2, 1>, scalar_prefetch = 0 : i64, scratch_operands = 0 : i64, tpu.core_type = #tpu.core_type<tc>, window_params = [{transform_indices = @transform_0, window_bounds = array<i64: 1, 4, 128>}, {transform_indices = @transform_1, window_bounds = array<i64: 1, 4, 128>}, {transform_indices = @transform_2, window_bounds = array<i64: 1, 4, 128>}, {pipeline_mode = #tpu.pipeline_mode<synchronous>, transform_indices = @transform_3, window_bounds = array<i64: 3, 8, 4>}, {transform_indices = @transform_4, window_bounds = array<i64: 1, 8, 1>}, {transform_indices = @transform_5, window_bounds = array<i64: 1, 8, 1>}, {transform_indices = @transform_6, window_bounds = array<i64: 1, 8, 1>}]} {
    %c0 = arith.constant 0 : index
    %c0_0 = arith.constant 0 : index
    %c0_1 = arith.constant 0 : index
    %0 = vector.load %arg2[%c0, %c0_0, %c0_1] : memref<1x4x128xf32, #tpu.memory_space<vmem>>, vector<1x4x128xf32>
    %1 = vector.shape_cast %0 : vector<1x4x128xf32> to vector<4x128xf32>
    %2 = tpu.iota {dimensions = array<i32: 1>} : vector<1x128xi32>
    %c0_i32 = arith.constant 0 : i32
    %3 = arith.cmpi eq, %arg1, %c0_i32 : i32
    %c0_i32_2 = arith.constant 0 : i32
    %4 = arith.cmpi eq, %arg1, %c0_i32_2 : i32
    %c1_i32 = arith.constant 1 : i32
    %5 = tpu.dynamic_rotate %1 by %c1_i32 dim 1 : vector<4x128xf32>, i32 -> vector<4x128xf32>
    %c0_3 = arith.constant 0 : index
    %c0_4 = arith.constant 0 : index
    %c0_5 = arith.constant 0 : index
    %6 = vector.load %arg3[%c0_3, %c0_4, %c0_5] : memref<1x4x128xf32, #tpu.memory_space<vmem>>, vector<1x4x128xf32>
    %7 = vector.shape_cast %6 : vector<1x4x128xf32> to vector<4x128xf32>
    %8 = vector.extract_strided_slice %7 {offsets = [0, 127], sizes = [4, 1], strides = [1, 1]} : vector<4x128xf32> to vector<4x1xf32>
    %cst = arith.constant 0.000000e+00 : f32
    %9 = vector.broadcast %cst : f32 to vector<4x1xf32>
    %10 = arith.select %3, %9, %8 : vector<4x1xf32>
    %c0_i32_6 = arith.constant 0 : i32
    %11 = vector.broadcast %c0_i32_6 : i32 to vector<1x128xi32>
    %12 = arith.cmpi eq, %2, %11 : vector<1x128xi32>
    %13 = vector.shape_cast %12 : vector<1x128xi1> to vector<1x128xi1>
    %14 = vector.broadcast %13 : vector<1x128xi1> to vector<4x128xi1>
    %15 = vector.shape_cast %10 : vector<4x1xf32> to vector<4x1xf32>
    %16 = vector.broadcast %15 : vector<4x1xf32> to vector<4x128xf32>
    %17 = arith.select %14, %16, %5 : vector<4x128xi1>, vector<4x128xf32>
    %c0_7 = arith.constant 0 : index
    %c0_8 = arith.constant 0 : index
    %c0_9 = arith.constant 0 : index
    %18 = vector.load %arg5[%c0_7, %c0_8, %c0_9] : memref<3x8x4xf32, #tpu.memory_space<vmem>>, vector<1x8x4xf32>
    %19 = vector.shape_cast %18 : vector<1x8x4xf32> to vector<8x4xf32>
    %cst_10 = arith.constant dense<0.000000e+00> : vector<8x128xf32>
    %20 = tpu.matmul %19, %17, %cst_10 {dimension_numbers = #tpu.dot_dimension_numbers<[1], [0], [0], [1], [0, 0, 1, 1], [], []>} : vector<8x4xf32>, vector<4x128xf32>, vector<8x128xf32> -> vector<8x128xf32>
    %c1 = arith.constant 1 : index
    %c0_11 = arith.constant 0 : index
    %c0_12 = arith.constant 0 : index
    %21 = vector.load %arg5[%c1, %c0_11, %c0_12] : memref<3x8x4xf32, #tpu.memory_space<vmem>>, vector<1x8x4xf32>
    %22 = vector.shape_cast %21 : vector<1x8x4xf32> to vector<8x4xf32>
    %cst_13 = arith.constant dense<0.000000e+00> : vector<8x128xf32>
    %23 = tpu.matmul %22, %1, %cst_13 {dimension_numbers = #tpu.dot_dimension_numbers<[1], [0], [0], [1], [0, 0, 1, 1], [], []>} : vector<8x4xf32>, vector<4x128xf32>, vector<8x128xf32> -> vector<8x128xf32>
    %24 = arith.addf %20, %23 : vector<8x128xf32>
    %c127_i32 = arith.constant 127 : i32
    %25 = tpu.dynamic_rotate %1 by %c127_i32 dim 1 : vector<4x128xf32>, i32 -> vector<4x128xf32>
    %c0_14 = arith.constant 0 : index
    %c0_15 = arith.constant 0 : index
    %c0_16 = arith.constant 0 : index
    %26 = vector.load %arg4[%c0_14, %c0_15, %c0_16] : memref<1x4x128xf32, #tpu.memory_space<vmem>>, vector<1x4x128xf32>
    %27 = vector.shape_cast %26 : vector<1x4x128xf32> to vector<4x128xf32>
    %28 = vector.extract_strided_slice %27 {offsets = [0, 0], sizes = [4, 1], strides = [1, 1]} : vector<4x128xf32> to vector<4x1xf32>
    %cst_17 = arith.constant 0.000000e+00 : f32
    %29 = vector.broadcast %cst_17 : f32 to vector<4x1xf32>
    %30 = arith.select %4, %29, %28 : vector<4x1xf32>
    %c127_i32_18 = arith.constant 127 : i32
    %31 = vector.broadcast %c127_i32_18 : i32 to vector<1x128xi32>
    %32 = arith.cmpi eq, %2, %31 : vector<1x128xi32>
    %33 = vector.shape_cast %32 : vector<1x128xi1> to vector<1x128xi1>
    %34 = vector.broadcast %33 : vector<1x128xi1> to vector<4x128xi1>
    %35 = vector.shape_cast %30 : vector<4x1xf32> to vector<4x1xf32>
    %36 = vector.broadcast %35 : vector<4x1xf32> to vector<4x128xf32>
    %37 = arith.select %34, %36, %25 : vector<4x128xi1>, vector<4x128xf32>
    %c2 = arith.constant 2 : index
    %c0_19 = arith.constant 0 : index
    %c0_20 = arith.constant 0 : index
    %38 = vector.load %arg5[%c2, %c0_19, %c0_20] : memref<3x8x4xf32, #tpu.memory_space<vmem>>, vector<1x8x4xf32>
    %39 = vector.shape_cast %38 : vector<1x8x4xf32> to vector<8x4xf32>
    %cst_21 = arith.constant dense<0.000000e+00> : vector<8x128xf32>
    %40 = tpu.matmul %39, %37, %cst_21 {dimension_numbers = #tpu.dot_dimension_numbers<[1], [0], [0], [1], [0, 0, 1, 1], [], []>} : vector<8x4xf32>, vector<4x128xf32>, vector<8x128xf32> -> vector<8x128xf32>
    %41 = arith.addf %24, %40 : vector<8x128xf32>
    %c128_i32 = arith.constant 128 : i32
    %42 = arith.muli %arg1, %c128_i32 : i32
    %43 = tpu.iota {dimensions = array<i32: 1>} : vector<1x128xi32>
    %44 = vector.broadcast %42 : i32 to vector<1x128xi32>
    %45 = arith.addi %44, %43 : vector<1x128xi32>
    %c16_i32 = arith.constant 16 : i32
    %46 = vector.broadcast %c16_i32 : i32 to vector<1x128xi32>
    %47 = arith.cmpi slt, %45, %46 : vector<1x128xi32>
    %c0_i32_22 = arith.constant 0 : i32
    %48 = arith.cmpi eq, %arg1, %c0_i32_22 : i32
    %49 = arith.extui %48 : i1 to i32
    %c0_i32_23 = arith.constant 0 : i32
    %50 = arith.cmpi ne, %49, %c0_i32_23 : i32
    scf.if %50 {
      %cst_42 = arith.constant 0.000000e+00 : f32
      %76 = vector.shape_cast %47 : vector<1x128xi1> to vector<1x128xi1>
      %77 = vector.broadcast %76 : vector<1x128xi1> to vector<8x128xi1>
      %78 = vector.broadcast %cst_42 : f32 to vector<8x128xf32>
      %79 = arith.select %77, %41, %78 : vector<8x128xi1>, vector<8x128xf32>
      %cst_43 = arith.constant dense<0.000000e+00> : vector<8xf32>
      %80 = vector.multi_reduction <add>, %79, %cst_43 [1] : vector<8x128xf32> to vector<8xf32>
      %81 = vector.shape_cast %80 : vector<8xf32> to vector<8x1xf32>
      %cst_44 = arith.constant 1.600000e+01 : f32
      %82 = vector.broadcast %cst_44 : f32 to vector<8x1xf32>
      %83 = arith.divf %81, %82 : vector<8x1xf32>
      %c0_45 = arith.constant 0 : index
      %c0_46 = arith.constant 0 : index
      %c0_47 = arith.constant 0 : index
      %84 = vector.load %arg6[%c0_45, %c0_46, %c0_47] : memref<1x8x1xf32, #tpu.memory_space<vmem>>, vector<1x8x1xf32>
      %85 = vector.shape_cast %84 : vector<1x8x1xf32> to vector<8x1xf32>
      %86 = vector.shape_cast %83 : vector<8x1xf32> to vector<1x8x1xf32>
      tpu.vector_store %arg6[%c0_45, %c0_46, %c0_47], %86 {strides = array<i32>} : memref<1x8x1xf32, #tpu.memory_space<vmem>>, vector<1x8x1xf32>,
      %cst_48 = arith.constant 0.000000e+00 : f32
      %87 = vector.broadcast %cst_48 : f32 to vector<1x8x1xf32>
      %c0_49 = arith.constant 0 : index
      %c0_50 = arith.constant 0 : index
      %c0_51 = arith.constant 0 : index
      %88 = vector.load %arg7[%c0_49, %c0_50, %c0_51] : memref<1x8x1xf32, #tpu.memory_space<vmem>>, vector<1x8x1xf32>
      tpu.vector_store %arg7[%c0_49, %c0_50, %c0_51], %87 {strides = array<i32>} : memref<1x8x1xf32, #tpu.memory_space<vmem>>, vector<1x8x1xf32>,
      %cst_52 = arith.constant 0.000000e+00 : f32
      %89 = vector.broadcast %cst_52 : f32 to vector<1x8x1xf32>
      %c0_53 = arith.constant 0 : index
      %c0_54 = arith.constant 0 : index
      %c0_55 = arith.constant 0 : index
      %90 = vector.load %arg8[%c0_53, %c0_54, %c0_55] : memref<1x8x1xf32, #tpu.memory_space<vmem>>, vector<1x8x1xf32>
      tpu.vector_store %arg8[%c0_53, %c0_54, %c0_55], %89 {strides = array<i32>} : memref<1x8x1xf32, #tpu.memory_space<vmem>>, vector<1x8x1xf32>,
    } else {
    }
    %c0_24 = arith.constant 0 : index
    %c0_25 = arith.constant 0 : index
    %c0_26 = arith.constant 0 : index
    %51 = vector.load %arg6[%c0_24, %c0_25, %c0_26] : memref<1x8x1xf32, #tpu.memory_space<vmem>>, vector<1x8x1xf32>
    %52 = vector.shape_cast %51 : vector<1x8x1xf32> to vector<8x1xf32>
    %53 = vector.broadcast %52 : vector<8x1xf32> to vector<8x128xf32>
    %54 = arith.subf %41, %53 : vector<8x128xf32>
    %cst_27 = arith.constant 0.000000e+00 : f32
    %55 = vector.shape_cast %47 : vector<1x128xi1> to vector<1x128xi1>
    %56 = vector.broadcast %55 : vector<1x128xi1> to vector<8x128xi1>
    %57 = vector.broadcast %cst_27 : f32 to vector<8x128xf32>
    %58 = arith.select %56, %54, %57 : vector<8x128xi1>, vector<8x128xf32>
    %c0_28 = arith.constant 0 : index
    %c0_29 = arith.constant 0 : index
    %c0_30 = arith.constant 0 : index
    %59 = vector.load %arg7[%c0_28, %c0_29, %c0_30] : memref<1x8x1xf32, #tpu.memory_space<vmem>>, vector<1x8x1xf32>
    %60 = vector.shape_cast %59 : vector<1x8x1xf32> to vector<8x1xf32>
    %cst_31 = arith.constant dense<0.000000e+00> : vector<8xf32>
    %61 = vector.multi_reduction <add>, %58, %cst_31 [1] : vector<8x128xf32> to vector<8xf32>
    %62 = vector.shape_cast %61 : vector<8xf32> to vector<8x1xf32>
    %63 = arith.addf %60, %62 : vector<8x1xf32>
    %c0_32 = arith.constant 0 : index
    %c0_33 = arith.constant 0 : index
    %c0_34 = arith.constant 0 : index
    %64 = vector.load %arg7[%c0_32, %c0_33, %c0_34] : memref<1x8x1xf32, #tpu.memory_space<vmem>>, vector<1x8x1xf32>
    %65 = vector.shape_cast %64 : vector<1x8x1xf32> to vector<8x1xf32>
    %66 = vector.shape_cast %63 : vector<8x1xf32> to vector<1x8x1xf32>
    tpu.vector_store %arg7[%c0_32, %c0_33, %c0_34], %66 {strides = array<i32>} : memref<1x8x1xf32, #tpu.memory_space<vmem>>, vector<1x8x1xf32>,
    %c0_35 = arith.constant 0 : index
    %c0_36 = arith.constant 0 : index
    %c0_37 = arith.constant 0 : index
    %67 = vector.load %arg8[%c0_35, %c0_36, %c0_37] : memref<1x8x1xf32, #tpu.memory_space<vmem>>, vector<1x8x1xf32>
    %68 = vector.shape_cast %67 : vector<1x8x1xf32> to vector<8x1xf32>
    %69 = arith.mulf %58, %58 : vector<8x128xf32>
    %cst_38 = arith.constant dense<0.000000e+00> : vector<8xf32>
    %70 = vector.multi_reduction <add>, %69, %cst_38 [1] : vector<8x128xf32> to vector<8xf32>
    %71 = vector.shape_cast %70 : vector<8xf32> to vector<8x1xf32>
    %72 = arith.addf %68, %71 : vector<8x1xf32>
    %c0_39 = arith.constant 0 : index
    %c0_40 = arith.constant 0 : index
    %c0_41 = arith.constant 0 : index
    %73 = vector.load %arg8[%c0_39, %c0_40, %c0_41] : memref<1x8x1xf32, #tpu.memory_space<vmem>>, vector<1x8x1xf32>
    %74 = vector.shape_cast %73 : vector<1x8x1xf32> to vector<8x1xf32>
    %75 = vector.shape_cast %72 : vector<8x1xf32> to vector<1x8x1xf32>
    tpu.vector_store %arg8[%c0_39, %c0_40, %c0_41], %75 {strides = array<i32>} : memref<1x8x1xf32, #tpu.memory_space<vmem>>, vector<1x8x1xf32>,
    return
  }
  func.func @transform_0(%arg0: i32, %arg1: i32) -> (i32, i32, i32) {
    %c0_i32 = arith.constant 0 : i32
    %c0_i32_0 = arith.constant 0 : i32
    return %arg0, %c0_i32, %arg1 : i32, i32, i32
  }
  func.func @transform_1(%arg0: i32, %arg1: i32) -> (i32, i32, i32) {
    %c1_i32 = arith.constant 1 : i32
    %0 = arith.muli %arg1, %c1_i32 : i32
    %c1_i32_0 = arith.constant 1 : i32
    %1 = arith.subi %0, %c1_i32_0 : i32
    %c0_i32 = arith.constant 0 : i32
    %2 = arith.maxsi %1, %c0_i32 : i32
    %c0_i32_1 = arith.constant 0 : i32
    %c0_i32_2 = arith.constant 0 : i32
    return %arg0, %c0_i32_1, %2 : i32, i32, i32
  }
  func.func @transform_2(%arg0: i32, %arg1: i32) -> (i32, i32, i32) {
    %c1_i32 = arith.constant 1 : i32
    %0 = arith.addi %arg1, %c1_i32 : i32
    %c1_i32_0 = arith.constant 1 : i32
    %1 = arith.muli %0, %c1_i32_0 : i32
    %c0_i32 = arith.constant 0 : i32
    %2 = arith.minsi %1, %c0_i32 : i32
    %c0_i32_1 = arith.constant 0 : i32
    %c0_i32_2 = arith.constant 0 : i32
    return %arg0, %c0_i32_1, %2 : i32, i32, i32
  }
  func.func @transform_3(%arg0: i32, %arg1: i32) -> (i32, i32, i32) {
    %c0_i32 = arith.constant 0 : i32
    %c0_i32_0 = arith.constant 0 : i32
    %c0_i32_1 = arith.constant 0 : i32
    %c0_i32_2 = arith.constant 0 : i32
    return %c0_i32, %c0_i32_0, %c0_i32_1 : i32, i32, i32
  }
  func.func @transform_4(%arg0: i32, %arg1: i32) -> (i32, i32, i32) {
    %c0_i32 = arith.constant 0 : i32
    %c0_i32_0 = arith.constant 0 : i32
    %c0_i32_1 = arith.constant 0 : i32
    return %arg0, %c0_i32, %c0_i32_0 : i32, i32, i32
  }
  func.func @transform_5(%arg0: i32, %arg1: i32) -> (i32, i32, i32) {
    %c0_i32 = arith.constant 0 : i32
    %c0_i32_0 = arith.constant 0 : i32
    %c0_i32_1 = arith.constant 0 : i32
    return %arg0, %c0_i32, %c0_i32_0 : i32, i32, i32
  }
  func.func @transform_6(%arg0: i32, %arg1: i32) -> (i32, i32, i32) {
    %c0_i32 = arith.constant 0 : i32
    %c0_i32_0 = arith.constant 0 : i32
    %c0_i32_1 = arith.constant 0 : i32
    return %arg0, %c0_i32, %c0_i32_0 : i32, i32, i32
  }
}

module attributes {stable_mosaic.version = 11 : i64} {
  func.func @_apply_kernel(%arg0: i32, %arg1: i32, %arg2: memref<1x4x128xf32, #tpu.memory_space<vmem>>, %arg3: memref<1x4x128xf32, #tpu.memory_space<vmem>>, %arg4: memref<1x4x128xf32, #tpu.memory_space<vmem>>, %arg5: memref<3x8x4xf32, #tpu.memory_space<vmem>>, %arg6: memref<8x1xf32, #tpu.memory_space<vmem>>, %arg7: memref<1x8x16xf32, #tpu.memory_space<vmem>>) attributes {dimension_semantics = [#tpu.dimension_semantics<parallel>, #tpu.dimension_semantics<parallel>], iteration_bounds = array<i64: 2, 1>, scalar_prefetch = 0 : i64, scratch_operands = 0 : i64, tpu.core_type = #tpu.core_type<tc>, window_params = [{transform_indices = @transform_0, window_bounds = array<i64: 1, 4, 128>}, {transform_indices = @transform_1, window_bounds = array<i64: 1, 4, 128>}, {transform_indices = @transform_2, window_bounds = array<i64: 1, 4, 128>}, {pipeline_mode = #tpu.pipeline_mode<synchronous>, transform_indices = @transform_3, window_bounds = array<i64: 3, 8, 4>}, {pipeline_mode = #tpu.pipeline_mode<synchronous>, transform_indices = @transform_4, window_bounds = array<i64: 8, 1>}, {transform_indices = @transform_5, window_bounds = array<i64: 1, 8, 16>}]} {
    %c0 = arith.constant 0 : index
    %c0_0 = arith.constant 0 : index
    %c0_1 = arith.constant 0 : index
    %0 = vector.load %arg2[%c0, %c0_0, %c0_1] : memref<1x4x128xf32, #tpu.memory_space<vmem>>, vector<1x4x128xf32>
    %1 = vector.shape_cast %0 : vector<1x4x128xf32> to vector<4x128xf32>
    %2 = tpu.iota {dimensions = array<i32: 1>} : vector<1x128xi32>
    %c0_i32 = arith.constant 0 : i32
    %3 = arith.cmpi eq, %arg1, %c0_i32 : i32
    %c0_i32_2 = arith.constant 0 : i32
    %4 = arith.cmpi eq, %arg1, %c0_i32_2 : i32
    %c1_i32 = arith.constant 1 : i32
    %5 = tpu.dynamic_rotate %1 by %c1_i32 dim 1 : vector<4x128xf32>, i32 -> vector<4x128xf32>
    %c0_3 = arith.constant 0 : index
    %c0_4 = arith.constant 0 : index
    %c0_5 = arith.constant 0 : index
    %6 = vector.load %arg3[%c0_3, %c0_4, %c0_5] : memref<1x4x128xf32, #tpu.memory_space<vmem>>, vector<1x4x128xf32>
    %7 = vector.shape_cast %6 : vector<1x4x128xf32> to vector<4x128xf32>
    %8 = vector.extract_strided_slice %7 {offsets = [0, 127], sizes = [4, 1], strides = [1, 1]} : vector<4x128xf32> to vector<4x1xf32>
    %cst = arith.constant 0.000000e+00 : f32
    %9 = vector.broadcast %cst : f32 to vector<4x1xf32>
    %10 = arith.select %3, %9, %8 : vector<4x1xf32>
    %c0_i32_6 = arith.constant 0 : i32
    %11 = vector.broadcast %c0_i32_6 : i32 to vector<1x128xi32>
    %12 = arith.cmpi eq, %2, %11 : vector<1x128xi32>
    %13 = vector.shape_cast %12 : vector<1x128xi1> to vector<1x128xi1>
    %14 = vector.broadcast %13 : vector<1x128xi1> to vector<4x128xi1>
    %15 = vector.shape_cast %10 : vector<4x1xf32> to vector<4x1xf32>
    %16 = vector.broadcast %15 : vector<4x1xf32> to vector<4x128xf32>
    %17 = arith.select %14, %16, %5 : vector<4x128xi1>, vector<4x128xf32>
    %c0_7 = arith.constant 0 : index
    %c0_8 = arith.constant 0 : index
    %c0_9 = arith.constant 0 : index
    %18 = vector.load %arg5[%c0_7, %c0_8, %c0_9] : memref<3x8x4xf32, #tpu.memory_space<vmem>>, vector<1x8x4xf32>
    %19 = vector.shape_cast %18 : vector<1x8x4xf32> to vector<8x4xf32>
    %cst_10 = arith.constant dense<0.000000e+00> : vector<8x128xf32>
    %20 = tpu.matmul %19, %17, %cst_10 {dimension_numbers = #tpu.dot_dimension_numbers<[1], [0], [0], [1], [0, 0, 1, 1], [], []>} : vector<8x4xf32>, vector<4x128xf32>, vector<8x128xf32> -> vector<8x128xf32>
    %c1 = arith.constant 1 : index
    %c0_11 = arith.constant 0 : index
    %c0_12 = arith.constant 0 : index
    %21 = vector.load %arg5[%c1, %c0_11, %c0_12] : memref<3x8x4xf32, #tpu.memory_space<vmem>>, vector<1x8x4xf32>
    %22 = vector.shape_cast %21 : vector<1x8x4xf32> to vector<8x4xf32>
    %cst_13 = arith.constant dense<0.000000e+00> : vector<8x128xf32>
    %23 = tpu.matmul %22, %1, %cst_13 {dimension_numbers = #tpu.dot_dimension_numbers<[1], [0], [0], [1], [0, 0, 1, 1], [], []>} : vector<8x4xf32>, vector<4x128xf32>, vector<8x128xf32> -> vector<8x128xf32>
    %24 = arith.addf %20, %23 : vector<8x128xf32>
    %c127_i32 = arith.constant 127 : i32
    %25 = tpu.dynamic_rotate %1 by %c127_i32 dim 1 : vector<4x128xf32>, i32 -> vector<4x128xf32>
    %c0_14 = arith.constant 0 : index
    %c0_15 = arith.constant 0 : index
    %c0_16 = arith.constant 0 : index
    %26 = vector.load %arg4[%c0_14, %c0_15, %c0_16] : memref<1x4x128xf32, #tpu.memory_space<vmem>>, vector<1x4x128xf32>
    %27 = vector.shape_cast %26 : vector<1x4x128xf32> to vector<4x128xf32>
    %28 = vector.extract_strided_slice %27 {offsets = [0, 0], sizes = [4, 1], strides = [1, 1]} : vector<4x128xf32> to vector<4x1xf32>
    %cst_17 = arith.constant 0.000000e+00 : f32
    %29 = vector.broadcast %cst_17 : f32 to vector<4x1xf32>
    %30 = arith.select %4, %29, %28 : vector<4x1xf32>
    %c127_i32_18 = arith.constant 127 : i32
    %31 = vector.broadcast %c127_i32_18 : i32 to vector<1x128xi32>
    %32 = arith.cmpi eq, %2, %31 : vector<1x128xi32>
    %33 = vector.shape_cast %32 : vector<1x128xi1> to vector<1x128xi1>
    %34 = vector.broadcast %33 : vector<1x128xi1> to vector<4x128xi1>
    %35 = vector.shape_cast %30 : vector<4x1xf32> to vector<4x1xf32>
    %36 = vector.broadcast %35 : vector<4x1xf32> to vector<4x128xf32>
    %37 = arith.select %34, %36, %25 : vector<4x128xi1>, vector<4x128xf32>
    %c2 = arith.constant 2 : index
    %c0_19 = arith.constant 0 : index
    %c0_20 = arith.constant 0 : index
    %38 = vector.load %arg5[%c2, %c0_19, %c0_20] : memref<3x8x4xf32, #tpu.memory_space<vmem>>, vector<1x8x4xf32>
    %39 = vector.shape_cast %38 : vector<1x8x4xf32> to vector<8x4xf32>
    %cst_21 = arith.constant dense<0.000000e+00> : vector<8x128xf32>
    %40 = tpu.matmul %39, %37, %cst_21 {dimension_numbers = #tpu.dot_dimension_numbers<[1], [0], [0], [1], [0, 0, 1, 1], [], []>} : vector<8x4xf32>, vector<4x128xf32>, vector<8x128xf32> -> vector<8x128xf32>
    %41 = arith.addf %24, %40 : vector<8x128xf32>
    %c0_22 = arith.constant 0 : index
    %c0_23 = arith.constant 0 : index
    %42 = vector.load %arg6[%c0_22, %c0_23] : memref<8x1xf32, #tpu.memory_space<vmem>>, vector<8x1xf32>
    %43 = vector.broadcast %42 : vector<8x1xf32> to vector<8x128xf32>
    %44 = arith.addf %41, %43 : vector<8x128xf32>
    %cst_24 = arith.constant 0.000000e+00 : f32
    %45 = vector.broadcast %cst_24 : f32 to vector<8x128xf32>
    %46 = arith.cmpf ogt, %44, %45 : vector<8x128xf32>
    %cst_25 = arith.constant 2.000000e-01 : f32
    %47 = vector.broadcast %cst_25 : f32 to vector<8x128xf32>
    %48 = arith.mulf %47, %44 : vector<8x128xf32>
    %49 = arith.select %46, %44, %48 : vector<8x128xi1>, vector<8x128xf32>
    %50 = vector.extract_strided_slice %49 {offsets = [0, 0], sizes = [8, 16], strides = [1, 1]} : vector<8x128xf32> to vector<8x16xf32>
    %c0_26 = arith.constant 0 : index
    %c0_27 = arith.constant 0 : index
    %c0_28 = arith.constant 0 : index
    %51 = vector.load %arg7[%c0_26, %c0_27, %c0_28] : memref<1x8x16xf32, #tpu.memory_space<vmem>>, vector<1x8x16xf32>
    %52 = vector.shape_cast %51 : vector<1x8x16xf32> to vector<8x16xf32>
    %53 = vector.shape_cast %50 : vector<8x16xf32> to vector<1x8x16xf32>
    tpu.vector_store %arg7[%c0_26, %c0_27, %c0_28], %53 {strides = array<i32>} : memref<1x8x16xf32, #tpu.memory_space<vmem>>, vector<1x8x16xf32>,
    return
  }
  func.func @transform_0(%arg0: i32, %arg1: i32) -> (i32, i32, i32) {
    %c0_i32 = arith.constant 0 : i32
    %c0_i32_0 = arith.constant 0 : i32
    return %arg0, %c0_i32, %arg1 : i32, i32, i32
  }
  func.func @transform_1(%arg0: i32, %arg1: i32) -> (i32, i32, i32) {
    %c1_i32 = arith.constant 1 : i32
    %0 = arith.muli %arg1, %c1_i32 : i32
    %c1_i32_0 = arith.constant 1 : i32
    %1 = arith.subi %0, %c1_i32_0 : i32
    %c0_i32 = arith.constant 0 : i32
    %2 = arith.maxsi %1, %c0_i32 : i32
    %c0_i32_1 = arith.constant 0 : i32
    %c0_i32_2 = arith.constant 0 : i32
    return %arg0, %c0_i32_1, %2 : i32, i32, i32
  }
  func.func @transform_2(%arg0: i32, %arg1: i32) -> (i32, i32, i32) {
    %c1_i32 = arith.constant 1 : i32
    %0 = arith.addi %arg1, %c1_i32 : i32
    %c1_i32_0 = arith.constant 1 : i32
    %1 = arith.muli %0, %c1_i32_0 : i32
    %c0_i32 = arith.constant 0 : i32
    %2 = arith.minsi %1, %c0_i32 : i32
    %c0_i32_1 = arith.constant 0 : i32
    %c0_i32_2 = arith.constant 0 : i32
    return %arg0, %c0_i32_1, %2 : i32, i32, i32
  }
  func.func @transform_3(%arg0: i32, %arg1: i32) -> (i32, i32, i32) {
    %c0_i32 = arith.constant 0 : i32
    %c0_i32_0 = arith.constant 0 : i32
    %c0_i32_1 = arith.constant 0 : i32
    %c0_i32_2 = arith.constant 0 : i32
    return %c0_i32, %c0_i32_0, %c0_i32_1 : i32, i32, i32
  }
  func.func @transform_4(%arg0: i32, %arg1: i32) -> (i32, i32) {
    %c0_i32 = arith.constant 0 : i32
    %c0_i32_0 = arith.constant 0 : i32
    %c0_i32_1 = arith.constant 0 : i32
    return %c0_i32, %c0_i32_0 : i32, i32
  }
  func.func @transform_5(%arg0: i32, %arg1: i32) -> (i32, i32, i32) {
    %c0_i32 = arith.constant 0 : i32
    %c0_i32_0 = arith.constant 0 : i32
    return %arg0, %c0_i32, %arg1 : i32, i32, i32
  }
}

</mosaic_0001>

<llo_original>
// kernel: conv_block.2
$region0: #{conv_block.2}
  #allocation0 [shape = 'u32[]', space=smem, size = 0x4, offset = 0x4, fixed_abs, tag = 'smem constant byte address 0x4 - core index']
  #allocation1 [shape = 'u32[144,128]{1,0:T(1,128)}', space=vmem, size = 0x12000, scoped, tag = 'internal scratch']
  %s0 = inlined_call_operand.vmem [shape: f32[2,4,128], index: 0, kind: input, shape index: {}, may-alias: {0,1,2}]
  %s1 = inlined_call_operand.vmem [shape: f32[2,4,128], index: 1, kind: input, shape index: {}, may-alias: {0,1,2}]
  %s2 = inlined_call_operand.vmem [shape: f32[2,4,128], index: 2, kind: input, shape index: {}, may-alias: {0,1,2}]
  %s3 = inlined_call_operand.vmem [shape: f32[3,8,4], index: 3, kind: input, shape index: {}]
  %s4 = inlined_call_operand.vmem [shape: f32[2,8,1], index: 4, kind: output, shape index: {0}]
  %s5 = inlined_call_operand.vmem [shape: f32[2,8,1], index: 5, kind: output, shape index: {1}]
  %s6 = inlined_call_operand.vmem [shape: f32[2,8,1], index: 6, kind: output, shape index: {2}]
  %7 = xla_tuple %s4, %s5, %s6
  %s8 = sld [smem:[#allocation0]]
  $region69: #{conv_block.2} parent=0
    _
  %s10 = ssub.s32 1, %s8
  %s11 = scalar_select 0, %s10, %s8
  loop: start=0, step=1, limit=4
  $region2: #{conv_block.2} parent=0 // loop_pre_header
    _
  $region3: #{conv_block.2} parent=0 // loop_header
    %s13 = sphi 0, %s17
    %p14 = scmp.ge.s32.totalorder %s13, 4
    %s20 = sphi 0, %s32
    %s21 = sphi 0, %s28
    %s22 = sphi 0, %s20
    %s23 = sphi 0, %s21
    %s24 = sphi 0, %s22
    %s25 = sphi 0, %s23
    %s37 = sphi 0, %s39
    %s40 = sphi 0, %s37
    %s41 = sphi 0, %s40
    %s57 = sphi 0, %s41
    %s71 = sphi 0, %s73
    %s74 = sphi 0, %s71
    %s75 = sphi 0, %s74
    %s91 = sphi 0, %s75
    %s105 = sphi 0, %s107
    %s108 = sphi 0, %s105
    %s109 = sphi 0, %s108
    %s125 = sphi 0, %s109
    %s129 = sphi 0, %s129
    %s131 = sphi 0, %s129
    %s132 = sphi 0, %s131
    %s146 = sphi 0, %s132
    %s152 = sphi 0, %s154
    %s155 = sphi 0, %s152
    %s156 = sphi 0, %s155
    %s172 = sphi 0, %s156
    %s178 = sphi 0, %s180
    %s181 = sphi 0, %s178
    %s182 = sphi 0, %s181
    %s198 = sphi 0, %s182
    %s204 = sphi 0, %s206
    %s207 = sphi 0, %s204
    %s208 = sphi 0, %s207
    %s224 = sphi 0, %s208
  $region4: #{conv_block.2} parent=0 // loop_header_branch
    %16 = sbr.rel (%p14) target = $region8
  $region5: #{conv_block.2} parent=0 // loop_body
    %s18 = ssub.s32 %s13, 1
    %s19 = ssub.s32 %s13, 2
    %s26 = sadd.s32 1, %s21
    %p27 = scmp.ge.s32.totalorder %s26, 1
    %s28 = scalar_select %p27, 0, %s26
    %s29 = sadd.s32 1, %s20
    %s30 = scalar_select %p27, %s29, %s20
    %p31 = scmp.ge.s32.totalorder %s30, 2
    %s32 = scalar_select %p31, 0, %s30
    %s33 = ssub.s32 %s20, %s32
    %s34 = ssub.s32 %s21, %s28
    %s35 = sor.u32 %s33, %s34
    %p36 = scmp.eq.s32.totalorder %s35, 0
    %s38 = sadd.s32 %s37, 1
    %s39 = scalar_select %p36, %s37, %s38
    %p42 = pneg %p36
    %p43 = scmp.eq.s32.totalorder %s13, 1
    %p44 = por %p42, %p43
    %p45 = scmp.ne.s32.totalorder %s37, %s40
    %p46 = scmp.eq.s32.totalorder %s13, 0
    %p47 = por %p45, %p46
    %p48 = scmp.ne.s32.totalorder %s37, %s40
    %p49 = scmp.eq.s32.totalorder %s18, 1
    %p50 = por %p48, %p49
    %p51 = scmp.ne.s32.totalorder %s40, %s41
    %p52 = scmp.eq.s32.totalorder %s18, 0
    %p53 = por %p51, %p52
    %p54 = scmp.ne.s32.totalorder %s40, %s41
    %p55 = scmp.eq.s32.totalorder %s19, 1
    %p56 = por %p54, %p55
    %p58 = scmp.ne.s32.totalorder %s41, %s57
    %p59 = scmp.eq.s32.totalorder %s19, 0
    %p60 = por %p58, %p59
    %s61 = ssub.s32 %s21, 1
    %p62 = scmp.gt.s32.totalorder %s61, 0
    %s63 = scalar_select %p62, %s61, 0
    %s64 = ssub.s32 %s28, 1
    %p65 = scmp.gt.s32.totalorder %s64, 0
    %s66 = scalar_select %p65, %s64, 0
    %s67 = ssub.s32 %s20, %s32
    %s68 = ssub.s32 %s63, %s66
    %s69 = sor.u32 %s67, %s68
    %p70 = scmp.eq.s32.totalorder %s69, 0
    %s72 = sadd.s32 %s71, 1
    %s73 = scalar_select %p70, %s71, %s72
    %p76 = pneg %p70
    %p77 = scmp.eq.s32.totalorder %s13, 1
    %p78 = por %p76, %p77
    %p79 = scmp.ne.s32.totalorder %s71, %s74
    %p80 = scmp.eq.s32.totalorder %s13, 0
    %p81 = por %p79, %p80
    %p82 = scmp.ne.s32.totalorder %s71, %s74
    %p83 = scmp.eq.s32.totalorder %s18, 1
    %p84 = por %p82, %p83
    %p85 = scmp.ne.s32.totalorder %s74, %s75
    %p86 = scmp.eq.s32.totalorder %s18, 0
    %p87 = por %p85, %p86
    %p88 = scmp.ne.s32.totalorder %s74, %s75
    %p89 = scmp.eq.s32.totalorder %s19, 1
    %p90 = por %p88, %p89
    %p92 = scmp.ne.s32.totalorder %s75, %s91
    %p93 = scmp.eq.s32.totalorder %s19, 0
    %p94 = por %p92, %p93
    %s95 = sadd.s32 %s21, 1
    %p96 = scmp.lt.s32.totalorder %s95, 0
    %s97 = scalar_select %p96, %s95, 0
    %s98 = sadd.s32 %s28, 1
    %p99 = scmp.lt.s32.totalorder %s98, 0
    %s100 = scalar_select %p99, %s98, 0
    %s101 = ssub.s32 %s20, %s32
    %s102 = ssub.s32 %s97, %s100
    %s103 = sor.u32 %s101, %s102
    %p104 = scmp.eq.s32.totalorder %s103, 0
    %s106 = sadd.s32 %s105, 1
    %s107 = scalar_select %p104, %s105, %s106
    %p110 = pneg %p104
    %p111 = scmp.eq.s32.totalorder %s13, 1
    %p112 = por %p110, %p111
    %p113 = scmp.ne.s32.totalorder %s105, %s108
    %p114 = scmp.eq.s32.totalorder %s13, 0
    %p115 = por %p113, %p114
    %p116 = scmp.ne.s32.totalorder %s105, %s108
    %p117 = scmp.eq.s32.totalorder %s18, 1
    %p118 = por %p116, %p117
    %p119 = scmp.ne.s32.totalorder %s108, %s109
    %p120 = scmp.eq.s32.totalorder %s18, 0
    %p121 = por %p119, %p120
    %p122 = scmp.ne.s32.totalorder %s108, %s109
    %p123 = scmp.eq.s32.totalorder %s19, 1
    %p124 = por %p122, %p123
    %p126 = scmp.ne.s32.totalorder %s109, %s125
    %p127 = scmp.eq.s32.totalorder %s19, 0
    %p128 = por %p126, %p127
    %s130 = sadd.s32 %s129, 1
    %p133 = scmp.eq.s32.totalorder %s13, 1
    %p134 = scmp.ne.s32.totalorder %s129, %s131
    %p135 = scmp.eq.s32.totalorder %s13, 0
    %p136 = por %p134, %p135
    %p137 = scmp.ne.s32.totalorder %s129, %s131
    %p138 = scmp.eq.s32.totalorder %s18, 1
    %p139 = por %p137, %p138
    %p140 = scmp.ne.s32.totalorder %s131, %s132
    %p141 = scmp.eq.s32.totalorder %s18, 0
    %p142 = por %p140, %p141
    %p143 = scmp.ne.s32.totalorder %s131, %s132
    %p144 = scmp.eq.s32.totalorder %s19, 1
    %p145 = por %p143, %p144
    %p147 = scmp.ne.s32.totalorder %s132, %s146
    %p148 = scmp.eq.s32.totalorder %s19, 0
    %p149 = por %p147, %p148
    %s150 = ssub.s32 %s20, %s32
    %p151 = scmp.eq.s32.totalorder %s150, 0
    %s153 = sadd.s32 %s152, 1
    %s154 = scalar_select %p151, %s152, %s153
    %p157 = pneg %p151
    %p158 = scmp.eq.s32.totalorder %s13, 1
    %p159 = por %p157, %p158
    %p160 = scmp.ne.s32.totalorder %s152, %s155
    %p161 = scmp.eq.s32.totalorder %s13, 0
    %p162 = por %p160, %p161
    %p163 = scmp.ne.s32.totalorder %s152, %s155
    %p164 = scmp.eq.s32.totalorder %s18, 1
    %p165 = por %p163, %p164
    %p166 = scmp.ne.s32.totalorder %s155, %s156
    %p167 = scmp.eq.s32.totalorder %s18, 0
    %p168 = por %p166, %p167
    %p169 = scmp.ne.s32.totalorder %s155, %s156
    %p170 = scmp.eq.s32.totalorder %s19, 1
    %p171 = por %p169, %p170
    %p173 = scmp.ne.s32.totalorder %s156, %s172
    %p174 = scmp.eq.s32.totalorder %s19, 0
    %p175 = por %p173, %p174
    %s176 = ssub.s32 %s20, %s32
    %p177 = scmp.eq.s32.totalorder %s176, 0
    %s179 = sadd.s32 %s178, 1
    %s180 = scalar_select %p177, %s178, %s179
    %p183 = pneg %p177
    %p184 = scmp.eq.s32.totalorder %s13, 1
    %p185 = por %p183, %p184
    %p186 = scmp.ne.s32.totalorder %s178, %s181
    %p187 = scmp.eq.s32.totalorder %s13, 0
    %p188 = por %p186, %p187
    %p189 = scmp.ne.s32.totalorder %s178, %s181
    %p190 = scmp.eq.s32.totalorder %s18, 1
    %p191 = por %p189, %p190
    %p192 = scmp.ne.s32.totalorder %s181, %s182
    %p193 = scmp.eq.s32.totalorder %s18, 0
    %p194 = por %p192, %p193
    %p195 = scmp.ne.s32.totalorder %s181, %s182
    %p196 = scmp.eq.s32.totalorder %s19, 1
    %p197 = por %p195, %p196
    %p199 = scmp.ne.s32.totalorder %s182, %s198
    %p200 = scmp.eq.s32.totalorder %s19, 0
    %p201 = por %p199, %p200
    %s202 = ssub.s32 %s20, %s32
    %p203 = scmp.eq.s32.totalorder %s202, 0
    %s205 = sadd.s32 %s204, 1
    %s206 = scalar_select %p203, %s204, %s205
    %p209 = pneg %p203
    %p210 = scmp.eq.s32.totalorder %s13, 1
    %p211 = por %p209, %p210
    %p212 = scmp.ne.s32.totalorder %s204, %s207
    %p213 = scmp.eq.s32.totalorder %s13, 0
    %p214 = por %p212, %p213
    %p215 = scmp.ne.s32.totalorder %s204, %s207
    %p216 = scmp.eq.s32.totalorder %s18, 1
    %p217 = por %p215, %p216
    %p218 = scmp.ne.s32.totalorder %s207, %s208
    %p219 = scmp.eq.s32.totalorder %s18, 0
    %p220 = por %p218, %p219
    %p221 = scmp.ne.s32.totalorder %s207, %s208
    %p222 = scmp.eq.s32.totalorder %s19, 1
    %p223 = por %p221, %p222
    %p225 = scmp.ne.s32.totalorder %s208, %s224
    %p226 = scmp.eq.s32.totalorder %s19, 0
    %p227 = por %p225, %p226
    %p228 = scmp.le.s32.totalorder 1, %s13
    %p229 = scmp.lt.s32.totalorder %s13, 3
    %p230 = pnand %p228, %p229
    %p231 = pneg %p230
    // Predicated region
    $region9: #{conv_block.2} parent=5 // pred_check
      _
    $region10: #{conv_block.2} parent=5 // pred_check_branch
      %233 = sbr.rel (%p230) target = $region12
    $region11: #{conv_block.2} parent=5 // pred_region
      %s234 = ssub.s32 %s13, 1
      // Predicated region
      $region13: #{conv_block.2} parent=11 // pred_check
        %p235 = pneg %p142
      $region14: #{conv_block.2} parent=11 // pred_check_branch
        %237 = sbr.rel (%p235) target = $region16
      $region15: #{conv_block.2} parent=11 // pred_region
        _
      $region16: #{conv_block.2} parent=11 // pred_fallthru
        _
    $region12: #{conv_block.2} parent=5 // pred_fallthru
      _
    %p238 = scmp.lt.s32.totalorder %s13, 2
    // Predicated region
    $region17: #{conv_block.2} parent=5 // pred_check
      %p239 = pneg %p238
    $region18: #{conv_block.2} parent=5 // pred_check_branch
      %241 = sbr.rel (%p239) target = $region20
    $region19: #{conv_block.2} parent=5 // pred_region
      // Predicated region
      $region21: #{conv_block.2} parent=19 // pred_check
        %p242 = pneg %p47
      $region22: #{conv_block.2} parent=19 // pred_check_branch
        %244 = sbr.rel (%p242) target = $region24
      $region23: #{conv_block.2} parent=19 // pred_region
        %p245 = scmp.lt.s32.totalorder %s20, 1
        %s246 = scalar_select %p245, %s20, 1
        %p247 = scmp.lt.s32.totalorder %s21, 0
        %s248 = scalar_select %p247, %s21, 0
        %s249 = sadd.s32 %s248, %s246
        %s250 = smul.addr %s249, 4
        %s251 = scalar_lea.vmem %s0, %s250
      $region24: #{conv_block.2} parent=19 // pred_fallthru
        _
      // Predicated region
      $region25: #{conv_block.2} parent=19 // pred_check
        %p252 = pneg %p81
      $region26: #{conv_block.2} parent=19 // pred_check_branch
        %254 = sbr.rel (%p252) target = $region28
      $region27: #{conv_block.2} parent=19 // pred_region
        %s255 = ssub.s32 %s21, 1
        %p256 = scmp.gt.s32.totalorder %s255, 0
        %s257 = scalar_select %p256, %s255, 0
        %p258 = scmp.lt.s32.totalorder %s20, 1
        %s259 = scalar_select %p258, %s20, 1
        %p260 = scmp.lt.s32.totalorder %s257, 0
        %s261 = scalar_select %p260, %s257, 0
        %s262 = sadd.s32 %s261, %s259
        %s263 = smul.addr %s262, 4
        %s264 = scalar_lea.vmem %s1, %s263
        %s265 = ssub.s32 %s21, 1
        %p266 = scmp.gt.s32.totalorder %s265, 0
        %s267 = scalar_select %p266, %s265, 0
      $region28: #{conv_block.2} parent=19 // pred_fallthru
        _
      // Predicated region
      $region29: #{conv_block.2} parent=19 // pred_check
        %p268 = pneg %p115
      $region30: #{conv_block.2} parent=19 // pred_check_branch
        %270 = sbr.rel (%p268) target = $region32
      $region31: #{conv_block.2} parent=19 // pred_region
        %s271 = sadd.s32 %s21, 1
        %p272 = scmp.lt.s32.totalorder %s271, 0
        %s273 = scalar_select %p272, %s271, 0
        %p274 = scmp.lt.s32.totalorder %s20, 1
        %s275 = scalar_select %p274, %s20, 1
        %p276 = scmp.lt.s32.totalorder %s273, 0
        %s277 = scalar_select %p276, %s273, 0
        %s278 = sadd.s32 %s277, %s275
        %s279 = smul.addr %s278, 4
        %s280 = scalar_lea.vmem %s2, %s279
        %s281 = sadd.s32 %s21, 1
        %p282 = scmp.lt.s32.totalorder %s281, 0
        %s283 = scalar_select %p282, %s281, 0
      $region32: #{conv_block.2} parent=19 // pred_fallthru
        _
    $region20: #{conv_block.2} parent=5 // pred_fallthru
      _
    %p284 = scmp.le.s32.totalorder 1, %s13
    %p285 = scmp.lt.s32.totalorder %s13, 3
    %p286 = pnand %p284, %p285
    %p287 = pneg %p286
    // Predicated region
    $region33: #{conv_block.2} parent=5 // pred_check
      _
    $region34: #{conv_block.2} parent=5 // pred_check_branch
      %289 = sbr.rel (%p286) target = $region36
    $region35: #{conv_block.2} parent=5 // pred_region
      %s290 = ssub.s32 %s13, 1
      %p291 = scmp.lt.s32.totalorder %s22, 1
      %s292 = scalar_select %p291, %s22, 1
      %p293 = scmp.lt.s32.totalorder %s23, 0
      %s294 = scalar_select %p293, %s23, 0
      %s295 = sadd.s32 %s294, %s292
      %s296 = smul.addr %s295, 4
      %s297 = scalar_lea.vmem %s0, %s296
      %p298 = pneg %p53
      %p299 = pneg %p50
      %s300 = ssub.s32 %s23, 1
      %p301 = scmp.gt.s32.totalorder %s300, 0
      %s302 = scalar_select %p301, %s300, 0
      %p303 = scmp.lt.s32.totalorder %s22, 1
      %s304 = scalar_select %p303, %s22, 1
      %p305 = scmp.lt.s32.totalorder %s302, 0
      %s306 = scalar_select %p305, %s302, 0
      %s307 = sadd.s32 %s306, %s304
      %s308 = smul.addr %s307, 4
      %s309 = scalar_lea.vmem %s1, %s308
      %p310 = pneg %p87
      %p311 = pneg %p84
      %s312 = sadd.s32 %s23, 1
      %p313 = scmp.lt.s32.totalorder %s312, 0
      %s314 = scalar_select %p313, %s312, 0
      %p315 = scmp.lt.s32.totalorder %s22, 1
      %s316 = scalar_select %p315, %s22, 1
      %p317 = scmp.lt.s32.totalorder %s314, 0
      %s318 = scalar_select %p317, %s314, 0
      %s319 = sadd.s32 %s318, %s316
      %s320 = smul.addr %s319, 4
      %s321 = scalar_lea.vmem %s2, %s320
      %p322 = pneg %p121
      %p323 = pneg %p118
      %p324 = pneg %p142
      %p325 = pneg %p139
      %p326 = pneg %p168
      %p327 = pneg %p165
      %p328 = scmp.lt.s32.totalorder %s22, 1
      %s329 = scalar_select %p328, %s22, 1
      %s330 = smul.addr %s329, 8
      %s331 = scalar_lea.vmem %s4, %s330
      %p332 = pneg %p194
      %p333 = pneg %p191
      %p334 = scmp.lt.s32.totalorder %s22, 1
      %s335 = scalar_select %p334, %s22, 1
      %s336 = smul.addr %s335, 8
      %s337 = scalar_lea.vmem %s5, %s336
      %p338 = pneg %p220
      %p339 = pneg %p217
      %p340 = scmp.lt.s32.totalorder %s22, 1
      %s341 = scalar_select %p340, %s22, 1
      %s342 = smul.addr %s341, 8
      %s343 = scalar_lea.vmem %s6, %s342
      %p344 = scmp.lt.s32.totalorder %s22, 1
      %s345 = scalar_select %p344, %s22, 1
      %p346 = scmp.lt.s32.totalorder %s23, 0
      %s347 = scalar_select %p346, %s23, 0
      %s348 = sadd.s32 %s347, %s345
      %s349 = smul.addr %s348, 4
      %s350 = scalar_lea.vmem %s0, %s349
      %s351 = ssub.s32 %s23, 1
      %p352 = scmp.gt.s32.totalorder %s351, 0
      %s353 = scalar_select %p352, %s351, 0
      %p354 = scmp.lt.s32.totalorder %s22, 1
      %s355 = scalar_select %p354, %s22, 1
      %p356 = scmp.lt.s32.totalorder %s353, 0
      %s357 = scalar_select %p356, %s353, 0
      %s358 = sadd.s32 %s357, %s355
      %s359 = smul.addr %s358, 4
      %s360 = scalar_lea.vmem %s1, %s359
      %s361 = ssub.s32 %s23, 1
      %p362 = scmp.gt.s32.totalorder %s361, 0
      %s363 = scalar_select %p362, %s361, 0
      %s364 = sadd.s32 %s23, 1
      %p365 = scmp.lt.s32.totalorder %s364, 0
      %s366 = scalar_select %p365, %s364, 0
      %p367 = scmp.lt.s32.totalorder %s22, 1
      %s368 = scalar_select %p367, %s22, 1
      %p369 = scmp.lt.s32.totalorder %s366, 0
      %s370 = scalar_select %p369, %s366, 0
      %s371 = sadd.s32 %s370, %s368
      %s372 = smul.addr %s371, 4
      %s373 = scalar_lea.vmem %s2, %s372
      %s374 = sadd.s32 %s23, 1
      %p375 = scmp.lt.s32.totalorder %s374, 0
      %s376 = scalar_select %p375, %s374, 0
      %p377 = scmp.lt.s32.totalorder %s22, 1
      %s378 = scalar_select %p377, %s22, 1
      %s379 = smul.addr %s378, 8
      %s380 = scalar_lea.vmem %s4, %s379
      %p381 = scmp.lt.s32.totalorder %s22, 1
      %s382 = scalar_select %p381, %s22, 1
      %s383 = smul.addr %s382, 8
      %s384 = scalar_lea.vmem %s5, %s383
      %p385 = scmp.lt.s32.totalorder %s22, 1
      %s386 = scalar_select %p385, %s22, 1
      %s387 = smul.addr %s386, 8
      %s388 = scalar_lea.vmem %s6, %s387
      %v389 = vld [vmem:[%s350] sm:$0xf]
      %v390 = vlaneseq
      %v391 = vand.u32 %v390, 127
      %p392 = scmp.eq.s32.totalorder %s23, 0
      %393 = vrot.lane.b32.xlu0 %v389, 1
      %v394 = vpop.permute.xlu0 %393
      %v395 = vld [vmem:[%s360] sm:$0xf]
      %s396 = scalar_select %p392, 1, 0
      %v397 = vstv %s396
      %vm398 = vcmp.eq.s32.totalorder %v397, 1
      %v399 = vsel %vm398, 0.0, %v395
      %vm400 = vcmp.eq.s32.totalorder %v391, 0
      %v401 = vsel %vm400, 1, 0
      %vm402 = vcmp.eq.s32.totalorder %v401, 1
      %404 = vset.pattern.permute.xlu0 127
      %405 = vperm.xlu0 %404, %v399
      %v406 = vpop.permute.xlu0 %405
      %v408 = vsel %vm402, %v406, %v394
      %v409 = vld [vmem:[%s3] sm:$0xff]
      %s410 = scalar_lea.vmem %s3, 8
      %v411 = vld [vmem:[%s410] sm:$0xff]
      %vm412 = vcmask 31744
      %v414 = vsel %vm412, %v411, 0
      %vm416 = vcmask 1043456
      %v418 = vsel %vm416, %v389, 0
      %420 = vmatprep.subr.mxu0 0.0
      %421 = vmatpush1.msra.mxu0 %v418
      %422 = vmatprep.subr.mxu0 0.0
      %423 = vmatpush1.msra.mxu0 0.0
      %424 = vmatprep.subr.mxu0 0.0
      %425 = vmatpush1.msra.mxu0 0.0
      %426 = vmatprep.subr.mxu0 0.0
      %427 = vmatpush1.msra.mxu0 0.0
      %428 = vmatprep.subr.mxu0 0.0
      %429 = vmatpush1.msra.mxu0 0.0
      %430 = vmatprep.subr.mxu0 0.0
      %431 = vmatpush1.msra.mxu0 0.0
      %432 = vmatprep.subr.mxu0 0.0
      %433 = vmatpush1.msra.mxu0 0.0
      %434 = vmatprep.subr.mxu0 0.0
      %435 = vmatpush1.msra.mxu0 0.0
      %436 = vmatprep.subr.mxu0 0.0
      %437 = vmatpush1.msra.mxu0 0.0
      %438 = vmatprep.subr.mxu0 0.0
      %439 = vmatpush1.msra.mxu0 0.0
      %440 = vmatprep.subr.mxu0 0.0
      %441 = vmatpush1.msra.mxu0 0.0
      %442 = vmatprep.subr.mxu0 0.0
      %443 = vmatpush1.msra.mxu0 0.0
      %444 = vmatprep.subr.mxu0 0.0
      %445 = vmatpush1.msra.mxu0 0.0
      %446 = vmatprep.subr.mxu0 0.0
      %447 = vmatpush1.msra.mxu0 0.0
      %448 = vmatprep.subr.mxu0 0.0
      %449 = vmatpush1.msra.mxu0 0.0
      %450 = vmatprep.subr.mxu0 0.0
      %451 = vmatpush1.msra.mxu0 0.0
      %452 = vmatprep.subr.mxu0 0.0
      %453 = vmatpush1.msra.mxu0 0.0
      %454 = vmatprep.subr.mxu0 0.0
      %455 = vmatpush1.msra.mxu0 0.0
      %456 = vmatprep.subr.mxu0 0.0
      %457 = vmatpush1.msra.mxu0 0.0
      %458 = vmatprep.subr.mxu0 0.0
      %459 = vmatpush1.msra.mxu0 0.0
      %460 = vmatprep.subr.mxu0 0.0
      %461 = vmatpush1.msra.mxu0 0.0
      %462 = vmatprep.subr.mxu0 0.0
      %463 = vmatpush1.msra.mxu0 0.0
      %464 = vmatprep.subr.mxu0 0.0
      %465 = vmatpush1.msra.mxu0 0.0
      %466 = vmatprep.subr.mxu0 0.0
      %467 = vmatpush1.msra.mxu0 0.0
      %468 = vmatprep.subr.mxu0 0.0
      %469 = vmatpush1.msra.mxu0 0.0
      %470 = vmatprep.subr.mxu0 0.0
      %471 = vmatpush1.msra.mxu0 0.0
      %472 = vmatprep.subr.mxu0 0.0
      %473 = vmatpush1.msra.mxu0 0.0
      %474 = vmatprep.subr.mxu0 0.0
      %475 = vmatpush1.msra.mxu0 0.0
      %476 = vmatprep.subr.mxu0 0.0
      %477 = vmatpush1.msra.mxu0 0.0
      %478 = vmatprep.subr.mxu0 0.0
      %479 = vmatpush1.msra.mxu0 0.0
      %480 = vmatprep.subr.mxu0 0.0
      %481 = vmatpush1.msra.mxu0 0.0
      %482 = vmatprep.subr.mxu0 0.0
      %483 = vmatpush1.msra.mxu0 0.0
      %484 = vmatprep.mubr.f32.mxu0 0.0
      %485 = vmatmul.mubr.f32.gmra.mrb[0].mxu0 %v414
      %v486 = vpop.f32.mrb[0].mxu0
      %v487 = vadd.f32 0.0, %v486
      %v488 = vpop.f32.mrb[0].mxu0
      %489 = vdwg.mxu0
      %v491 = vsel %vm412, %v409, 0
      %v494 = vsel %vm416, %v408, 0
      %496 = vmatprep.subr.mxu0 0.0
      %497 = vmatpush1.msra.mxu0 %v494
      %498 = vmatprep.subr.mxu0 0.0
      %499 = vmatpush1.msra.mxu0 0.0
      %500 = vmatprep.subr.mxu0 0.0
      %501 = vmatpush1.msra.mxu0 0.0
      %502 = vmatprep.subr.mxu0 0.0
      %503 = vmatpush1.msra.mxu0 0.0
      %504 = vmatprep.subr.mxu0 0.0
      %505 = vmatpush1.msra.mxu0 0.0
      %506 = vmatprep.subr.mxu0 0.0
      %507 = vmatpush1.msra.mxu0 0.0
      %508 = vmatprep.subr.mxu0 0.0
      %509 = vmatpush1.msra.mxu0 0.0
      %510 = vmatprep.subr.mxu0 0.0
      %511 = vmatpush1.msra.mxu0 0.0
      %512 = vmatprep.subr.mxu0 0.0
      %513 = vmatpush1.msra.mxu0 0.0
      %514 = vmatprep.subr.mxu0 0.0
      %515 = vmatpush1.msra.mxu0 0.0
      %516 = vmatprep.subr.mxu0 0.0
      %517 = vmatpush1.msra.mxu0 0.0
      %518 = vmatprep.subr.mxu0 0.0
      %519 = vmatpush1.msra.mxu0 0.0
      %520 = vmatprep.subr.mxu0 0.0
      %521 = vmatpush1.msra.mxu0 0.0
      %522 = vmatprep.subr.mxu0 0.0
      %523 = vmatpush1.msra.mxu0 0.0
      %524 = vmatprep.subr.mxu0 0.0
      %525 = vmatpush1.msra.mxu0 0.0
      %526 = vmatprep.subr.mxu0 0.0
      %527 = vmatpush1.msra.mxu0 0.0
      %528 = vmatprep.subr.mxu0 0.0
      %529 = vmatpush1.msra.mxu0 0.0
      %530 = vmatprep.subr.mxu0 0.0
      %531 = vmatpush1.msra.mxu0 0.0
      %532 = vmatprep.subr.mxu0 0.0
      %533 = vmatpush1.msra.mxu0 0.0
      %534 = vmatprep.subr.mxu0 0.0
      %535 = vmatpush1.msra.mxu0 0.0
      %536 = vmatprep.subr.mxu0 0.0
      %537 = vmatpush1.msra.mxu0 0.0
      %538 = vmatprep.subr.mxu0 0.0
      %539 = vmatpush1.msra.mxu0 0.0
      %540 = vmatprep.subr.mxu0 0.0
      %541 = vmatpush1.msra.mxu0 0.0
      %542 = vmatprep.subr.mxu0 0.0
      %543 = vmatpush1.msra.mxu0 0.0
      %544 = vmatprep.subr.mxu0 0.0
      %545 = vmatpush1.msra.mxu0 0.0
      %546 = vmatprep.subr.mxu0 0.0
      %547 = vmatpush1.msra.mxu0 0.0
      %548 = vmatprep.subr.mxu0 0.0
      %549 = vmatpush1.msra.mxu0 0.0
      %550 = vmatprep.subr.mxu0 0.0
      %551 = vmatpush1.msra.mxu0 0.0
      %552 = vmatprep.subr.mxu0 0.0
      %553 = vmatpush1.msra.mxu0 0.0
      %554 = vmatprep.subr.mxu0 0.0
      %555 = vmatpush1.msra.mxu0 0.0
      %556 = vmatprep.subr.mxu0 0.0
      %557 = vmatpush1.msra.mxu0 0.0
      %558 = vmatprep.subr.mxu0 0.0
      %559 = vmatpush1.msra.mxu0 0.0
      %560 = vmatprep.mubr.f32.mxu0 0.0
      %561 = vmatmul.mubr.f32.gmra.mrb[0].mxu0 %v491
      %v562 = vpop.f32.mrb[0].mxu0
      %v563 = vadd.f32 %v487, %v562
      %v564 = vpop.f32.mrb[0].mxu0
      %565 = vdwg.mxu0
      %566 = vrot.lane.b32.xlu0 %v389, 127
      %v567 = vpop.permute.xlu0 %566
      %v568 = vld [vmem:[%s373] sm:$0xf]
      %v569 = vsel %vm398, 0.0, %v568
      %vm570 = vcmp.eq.s32.totalorder %v391, 127
      %v571 = vsel %vm570, 1, 0
      %vm572 = vcmp.eq.s32.totalorder %v571, 1
      %574 = vset.pattern.permute.xlu0 0
      %575 = vperm.xlu0 %574, %v569
      %v576 = vpop.permute.xlu0 %575
      %v578 = vsel %vm572, %v576, %v567
      %s579 = scalar_lea.vmem %s3, 16
      %v580 = vld [vmem:[%s579] sm:$0xff]
      %v582 = vsel %vm412, %v580, 0
      %v585 = vsel %vm416, %v578, 0
      %587 = vmatprep.subr.mxu0 0.0
      %588 = vmatpush1.msra.mxu0 %v585
      %589 = vmatprep.subr.mxu0 0.0
      %590 = vmatpush1.msra.mxu0 0.0
      %591 = vmatprep.subr.mxu0 0.0
      %592 = vmatpush1.msra.mxu0 0.0
      %593 = vmatprep.subr.mxu0 0.0
      %594 = vmatpush1.msra.mxu0 0.0
      %595 = vmatprep.subr.mxu0 0.0
      %596 = vmatpush1.msra.mxu0 0.0
      %597 = vmatprep.subr.mxu0 0.0
      %598 = vmatpush1.msra.mxu0 0.0
      %599 = vmatprep.subr.mxu0 0.0
      %600 = vmatpush1.msra.mxu0 0.0
      %601 = vmatprep.subr.mxu0 0.0
      %602 = vmatpush1.msra.mxu0 0.0
      %603 = vmatprep.subr.mxu0 0.0
      %604 = vmatpush1.msra.mxu0 0.0
      %605 = vmatprep.subr.mxu0 0.0
      %606 = vmatpush1.msra.mxu0 0.0
      %607 = vmatprep.subr.mxu0 0.0
      %608 = vmatpush1.msra.mxu0 0.0
      %609 = vmatprep.subr.mxu0 0.0
      %610 = vmatpush1.msra.mxu0 0.0
      %611 = vmatprep.subr.mxu0 0.0
      %612 = vmatpush1.msra.mxu0 0.0
      %613 = vmatprep.subr.mxu0 0.0
      %614 = vmatpush1.msra.mxu0 0.0
      %615 = vmatprep.subr.mxu0 0.0
      %616 = vmatpush1.msra.mxu0 0.0
      %617 = vmatprep.subr.mxu0 0.0
      %618 = vmatpush1.msra.mxu0 0.0
      %619 = vmatprep.subr.mxu0 0.0
      %620 = vmatpush1.msra.mxu0 0.0
      %621 = vmatprep.subr.mxu0 0.0
      %622 = vmatpush1.msra.mxu0 0.0
      %623 = vmatprep.subr.mxu0 0.0
      %624 = vmatpush1.msra.mxu0 0.0
      %625 = vmatprep.subr.mxu0 0.0
      %626 = vmatpush1.msra.mxu0 0.0
      %627 = vmatprep.subr.mxu0 0.0
      %628 = vmatpush1.msra.mxu0 0.0
      %629 = vmatprep.subr.mxu0 0.0
      %630 = vmatpush1.msra.mxu0 0.0
      %631 = vmatprep.subr.mxu0 0.0
      %632 = vmatpush1.msra.mxu0 0.0
      %633 = vmatprep.subr.mxu0 0.0
      %634 = vmatpush1.msra.mxu0 0.0
      %635 = vmatprep.subr.mxu0 0.0
      %636 = vmatpush1.msra.mxu0 0.0
      %637 = vmatprep.subr.mxu0 0.0
      %638 = vmatpush1.msra.mxu0 0.0
      %639 = vmatprep.subr.mxu0 0.0
      %640 = vmatpush1.msra.mxu0 0.0
      %641 = vmatprep.subr.mxu0 0.0
      %642 = vmatpush1.msra.mxu0 0.0
      %643 = vmatprep.subr.mxu0 0.0
      %644 = vmatpush1.msra.mxu0 0.0
      %645 = vmatprep.subr.mxu0 0.0
      %646 = vmatpush1.msra.mxu0 0.0
      %647 = vmatprep.subr.mxu0 0.0
      %648 = vmatpush1.msra.mxu0 0.0
      %649 = vmatprep.subr.mxu0 0.0
      %650 = vmatpush1.msra.mxu0 0.0
      %651 = vmatprep.mubr.f32.mxu0 0.0
      %652 = vmatmul.mubr.f32.gmra.mrb[0].mxu0 %v582
      %v653 = vpop.f32.mrb[0].mxu0
      %v654 = vadd.f32 0.0, %v653
      %v655 = vpop.f32.mrb[0].mxu0
      %656 = vdwg.mxu0
      %v657 = vadd.f32 %v563, %v654
      %s658 = smul.u32 %s23, 128
      %v659 = vstv %s658
      %v660 = vadd.s32 %v659, %v391
      %vm661 = vcmp.lt.s32.totalorder %v660, 16
      // Predicated region
      $region37: #{conv_block.2} parent=35 // pred_check
        %p662 = pneg %p392
      $region38: #{conv_block.2} parent=35 // pred_check_branch
        %664 = sbr.rel (%p662) target = $region40
      $region39: #{conv_block.2} parent=35 // pred_region
        %v665 = vsel %vm661, 1, 0
        %vm666 = vcmp.eq.s32.totalorder %v665, 1
        %v667 = vsel %vm666, %v657, 0.0
        %668 = vadd.xlane.f32.xlu0 %v667
        %v669 = vpop.xlane.xlu0 %668
        %v670 = vrcp.pop 16.0
        %v671 = vmul.f32 %v669, %v670
        %vm672 = vcmask 7168
        %673 = vst.msk [vmem:[%s380] sm:$0xff] %vm672, %v671
        %674 = vst.msk [vmem:[%s384] sm:$0xff] %vm672, 0.0
        %675 = vst.msk [vmem:[%s388] sm:$0xff] %vm672, 0.0
      $region40: #{conv_block.2} parent=35 // pred_fallthru
        _
      %v676 = vld [vmem:[%s380] sm:$0xff]
      %678 = vset.pattern.permute.xlu0 0
      %679 = vperm.xlu0 %678, %v676
      %v680 = vpop.permute.xlu0 %679
      %v682 = vsub.f32 %v657, %v680
      %v683 = vsel %vm661, 1, 0
      %vm684 = vcmp.eq.s32.totalorder %v683, 1
      %v685 = vsel %vm684, %v682, 0.0
      %v686 = vld [vmem:[%s384] sm:$0xff]
      %687 = vadd.xlane.f32.xlu0 %v685
      %v688 = vpop.xlane.xlu0 %687
      %v689 = vadd.f32 %v686, %v688
      %vm690 = vcmask 7168
      %691 = vst.msk [vmem:[%s384] sm:$0xff] %vm690, %v689
      %v692 = vld [vmem:[%s388] sm:$0xff]
      %v693 = vmul.f32 %v685, %v685
      %694 = vadd.xlane.f32.xlu0 %v693
      %v695 = vpop.xlane.xlu0 %694
      %v696 = vadd.f32 %v692, %v695
      %697 = vst.msk [vmem:[%s388] sm:$0xff] %vm690, %v696
      %p698 = scmp.lt.s32.totalorder %s22, 1
      %s699 = scalar_select %p698, %s22, 1
      %s700 = smul.addr %s699, 8
      %s701 = scalar_lea.vmem %s4, %s700
      %p702 = scmp.lt.s32.totalorder %s22, 1
      %s703 = scalar_select %p702, %s22, 1
      %s704 = smul.addr %s703, 8
      %s705 = scalar_lea.vmem %s5, %s704
      %p706 = scmp.lt.s32.totalorder %s22, 1
      %s707 = scalar_select %p706, %s22, 1
      %s708 = smul.addr %s707, 8
      %s709 = scalar_lea.vmem %s6, %s708
      // Predicated region
      $region41: #{conv_block.2} parent=35 // pred_check
        %p710 = pneg %p165
      $region42: #{conv_block.2} parent=35 // pred_check_branch
        %712 = sbr.rel (%p710) target = $region44
      $region43: #{conv_block.2} parent=35 // pred_region
        _
      $region44: #{conv_block.2} parent=35 // pred_fallthru
        _
      // Predicated region
      $region45: #{conv_block.2} parent=35 // pred_check
        %p713 = pneg %p191
      $region46: #{conv_block.2} parent=35 // pred_check_branch
        %715 = sbr.rel (%p713) target = $region48
      $region47: #{conv_block.2} parent=35 // pred_region
        _
      $region48: #{conv_block.2} parent=35 // pred_fallthru
        _
      // Predicated region
      $region49: #{conv_block.2} parent=35 // pred_check
        %p716 = pneg %p217
      $region50: #{conv_block.2} parent=35 // pred_check_branch
        %718 = sbr.rel (%p716) target = $region52
      $region51: #{conv_block.2} parent=35 // pred_region
        _
      $region52: #{conv_block.2} parent=35 // pred_fallthru
        _
    $region36: #{conv_block.2} parent=5 // pred_fallthru
      _
    %p719 = scmp.le.s32.totalorder 2, %s13
    // Predicated region
    $region53: #{conv_block.2} parent=5 // pred_check
      %p720 = pneg %p719
    $region54: #{conv_block.2} parent=5 // pred_check_branch
      %722 = sbr.rel (%p720) target = $region56
    $region55: #{conv_block.2} parent=5 // pred_region
      %s723 = ssub.s32 %s13, 2
      // Predicated region
      $region57: #{conv_block.2} parent=55 // pred_check
        %p724 = pneg %p171
      $region58: #{conv_block.2} parent=55 // pred_check_branch
        %726 = sbr.rel (%p724) target = $region60
      $region59: #{conv_block.2} parent=55 // pred_region
        %p727 = scmp.lt.s32.totalorder %s24, 1
        %s728 = scalar_select %p727, %s24, 1
        %s729 = smul.addr %s728, 8
        %s730 = scalar_lea.vmem %s4, %s729
      $region60: #{conv_block.2} parent=55 // pred_fallthru
        _
      // Predicated region
      $region61: #{conv_block.2} parent=55 // pred_check
        %p731 = pneg %p197
      $region62: #{conv_block.2} parent=55 // pred_check_branch
        %733 = sbr.rel (%p731) target = $region64
      $region63: #{conv_block.2} parent=55 // pred_region
        %p734 = scmp.lt.s32.totalorder %s24, 1
        %s735 = scalar_select %p734, %s24, 1
        %s736 = smul.addr %s735, 8
        %s737 = scalar_lea.vmem %s5, %s736
      $region64: #{conv_block.2} parent=55 // pred_fallthru
        _
      // Predicated region
      $region65: #{conv_block.2} parent=55 // pred_check
        %p738 = pneg %p223
      $region66: #{conv_block.2} parent=55 // pred_check_branch
        %740 = sbr.rel (%p738) target = $region68
      $region67: #{conv_block.2} parent=55 // pred_region
        %p741 = scmp.lt.s32.totalorder %s24, 1
        %s742 = scalar_select %p741, %s24, 1
        %s743 = smul.addr %s742, 8
        %s744 = scalar_lea.vmem %s6, %s743
      $region68: #{conv_block.2} parent=55 // pred_fallthru
        _
    $region56: #{conv_block.2} parent=5 // pred_fallthru
      _
  $region6: #{conv_block.2} parent=0 // loop_footer
    %s17 = sadd.s32 1, %s13
  $region7: #{conv_block.2} parent=0 // loop_footer_branch
    %12 = sbr.rel target = $region3
  $region8: #{conv_block.2} parent=0 // loop_exit
    _

// kernel: conv_block.3
$region0: #{conv_block.3}
  #allocation0 [shape = 'u32[]', space=smem, size = 0x4, offset = 0x4, fixed_abs, tag = 'smem constant byte address 0x4 - core index']
  #allocation1 [shape = 'u32[144,128]{1,0:T(1,128)}', space=vmem, size = 0x12000, scoped, tag = 'internal scratch']
  %s0 = inlined_call_operand.vmem [shape: f32[2,4,128], index: 0, kind: input, shape index: {}, may-alias: {0,1,2}]
  %s1 = inlined_call_operand.vmem [shape: f32[2,4,128], index: 1, kind: input, shape index: {}, may-alias: {0,1,2}]
  %s2 = inlined_call_operand.vmem [shape: f32[2,4,128], index: 2, kind: input, shape index: {}, may-alias: {0,1,2}]
  %s3 = inlined_call_operand.vmem [shape: f32[3,8,4], index: 3, kind: input, shape index: {}]
  %s4 = inlined_call_operand.vmem [shape: f32[8,1], index: 4, kind: input, shape index: {}]
  %s5 = inlined_call_operand.hbm [shape: f32[2,8,16], index: 5, kind: output, shape index: {}]
  %s6 = sld [smem:[#allocation0]]
  $region53: #{conv_block.3} parent=0
    _
  %s8 = ssub.s32 1, %s6
  %s9 = scalar_select 0, %s8, %s6
  $region1: #{conv_block.3} parent=0
    #allocation2 [shape = 'u8[8192]{0}', space=vmem, size = 0x2000, scoped, tag = 'output window, operand 0']
    #allocation3 [shape = 's32[2]{0}', space=sflag, size = 0x8, scoped, tag = 'scoped memory for conv_block.3']
    %10 = vsyncpa [#allocation3], 0
    %s11 = scalar_lea.sflag [#allocation3], 1
    %12 = vsyncpa %s11, 0
    loop: start=0, step=1, limit=4
    $region2: #{conv_block.3} parent=1 // loop_pre_header
      _
    $region3: #{conv_block.3} parent=1 // loop_header
      %s14 = sphi 0, %s18
      %p15 = scmp.ge.s32.totalorder %s14, 4
      %s21 = sphi 0, %s33
      %s22 = sphi 0, %s29
      %s23 = sphi 0, %s21
      %s24 = sphi 0, %s22
      %s25 = sphi 0, %s23
      %s26 = sphi 0, %s24
      %s38 = sphi 0, %s40
      %s41 = sphi 0, %s38
      %s42 = sphi 0, %s41
      %s58 = sphi 0, %s42
      %s72 = sphi 0, %s74
      %s75 = sphi 0, %s72
      %s76 = sphi 0, %s75
      %s92 = sphi 0, %s76
      %s106 = sphi 0, %s108
      %s109 = sphi 0, %s106
      %s110 = sphi 0, %s109
      %s126 = sphi 0, %s110
      %s130 = sphi 0, %s130
      %s132 = sphi 0, %s130
      %s133 = sphi 0, %s132
      %s147 = sphi 0, %s133
      %s151 = sphi 0, %s151
      %s153 = sphi 0, %s151
      %s154 = sphi 0, %s153
      %s168 = sphi 0, %s154
      %s176 = sphi 0, %s178
      %s179 = sphi 0, %s176
      %s180 = sphi 0, %s179
      %s196 = sphi 0, %s180
    $region4: #{conv_block.3} parent=1 // loop_header_branch
      %17 = sbr.rel (%p15) target = $region8
    $region5: #{conv_block.3} parent=1 // loop_body
      %s19 = ssub.s32 %s14, 1
      %s20 = ssub.s32 %s14, 2
      %s27 = sadd.s32 1, %s22
      %p28 = scmp.ge.s32.totalorder %s27, 1
      %s29 = scalar_select %p28, 0, %s27
      %s30 = sadd.s32 1, %s21
      %s31 = scalar_select %p28, %s30, %s21
      %p32 = scmp.ge.s32.totalorder %s31, 2
      %s33 = scalar_select %p32, 0, %s31
      %s34 = ssub.s32 %s21, %s33
      %s35 = ssub.s32 %s22, %s29
      %s36 = sor.u32 %s34, %s35
      %p37 = scmp.eq.s32.totalorder %s36, 0
      %s39 = sadd.s32 %s38, 1
      %s40 = scalar_select %p37, %s38, %s39
      %p43 = pneg %p37
      %p44 = scmp.eq.s32.totalorder %s14, 1
      %p45 = por %p43, %p44
      %p46 = scmp.ne.s32.totalorder %s38, %s41
      %p47 = scmp.eq.s32.totalorder %s14, 0
      %p48 = por %p46, %p47
      %p49 = scmp.ne.s32.totalorder %s38, %s41
      %p50 = scmp.eq.s32.totalorder %s19, 1
      %p51 = por %p49, %p50
      %p52 = scmp.ne.s32.totalorder %s41, %s42
      %p53 = scmp.eq.s32.totalorder %s19, 0
      %p54 = por %p52, %p53
      %p55 = scmp.ne.s32.totalorder %s41, %s42
      %p56 = scmp.eq.s32.totalorder %s20, 1
      %p57 = por %p55, %p56
      %p59 = scmp.ne.s32.totalorder %s42, %s58
      %p60 = scmp.eq.s32.totalorder %s20, 0
      %p61 = por %p59, %p60
      %s62 = ssub.s32 %s22, 1
      %p63 = scmp.gt.s32.totalorder %s62, 0
      %s64 = scalar_select %p63, %s62, 0
      %s65 = ssub.s32 %s29, 1
      %p66 = scmp.gt.s32.totalorder %s65, 0
      %s67 = scalar_select %p66, %s65, 0
      %s68 = ssub.s32 %s21, %s33
      %s69 = ssub.s32 %s64, %s67
      %s70 = sor.u32 %s68, %s69
      %p71 = scmp.eq.s32.totalorder %s70, 0
      %s73 = sadd.s32 %s72, 1
      %s74 = scalar_select %p71, %s72, %s73
      %p77 = pneg %p71
      %p78 = scmp.eq.s32.totalorder %s14, 1
      %p79 = por %p77, %p78
      %p80 = scmp.ne.s32.totalorder %s72, %s75
      %p81 = scmp.eq.s32.totalorder %s14, 0
      %p82 = por %p80, %p81
      %p83 = scmp.ne.s32.totalorder %s72, %s75
      %p84 = scmp.eq.s32.totalorder %s19, 1
      %p85 = por %p83, %p84
      %p86 = scmp.ne.s32.totalorder %s75, %s76
      %p87 = scmp.eq.s32.totalorder %s19, 0
      %p88 = por %p86, %p87
      %p89 = scmp.ne.s32.totalorder %s75, %s76
      %p90 = scmp.eq.s32.totalorder %s20, 1
      %p91 = por %p89, %p90
      %p93 = scmp.ne.s32.totalorder %s76, %s92
      %p94 = scmp.eq.s32.totalorder %s20, 0
      %p95 = por %p93, %p94
      %s96 = sadd.s32 %s22, 1
      %p97 = scmp.lt.s32.totalorder %s96, 0
      %s98 = scalar_select %p97, %s96, 0
      %s99 = sadd.s32 %s29, 1
      %p100 = scmp.lt.s32.totalorder %s99, 0
      %s101 = scalar_select %p100, %s99, 0
      %s102 = ssub.s32 %s21, %s33
      %s103 = ssub.s32 %s98, %s101
      %s104 = sor.u32 %s102, %s103
      %p105 = scmp.eq.s32.totalorder %s104, 0
      %s107 = sadd.s32 %s106, 1
      %s108 = scalar_select %p105, %s106, %s107
      %p111 = pneg %p105
      %p112 = scmp.eq.s32.totalorder %s14, 1
      %p113 = por %p111, %p112
      %p114 = scmp.ne.s32.totalorder %s106, %s109
      %p115 = scmp.eq.s32.totalorder %s14, 0
      %p116 = por %p114, %p115
      %p117 = scmp.ne.s32.totalorder %s106, %s109
      %p118 = scmp.eq.s32.totalorder %s19, 1
      %p119 = por %p117, %p118
      %p120 = scmp.ne.s32.totalorder %s109, %s110
      %p121 = scmp.eq.s32.totalorder %s19, 0
      %p122 = por %p120, %p121
      %p123 = scmp.ne.s32.totalorder %s109, %s110
      %p124 = scmp.eq.s32.totalorder %s20, 1
      %p125 = por %p123, %p124
      %p127 = scmp.ne.s32.totalorder %s110, %s126
      %p128 = scmp.eq.s32.totalorder %s20, 0
      %p129 = por %p127, %p128
      %s131 = sadd.s32 %s130, 1
      %p134 = scmp.eq.s32.totalorder %s14, 1
      %p135 = scmp.ne.s32.totalorder %s130, %s132
      %p136 = scmp.eq.s32.totalorder %s14, 0
      %p137 = por %p135, %p136
      %p138 = scmp.ne.s32.totalorder %s130, %s132
      %p139 = scmp.eq.s32.totalorder %s19, 1
      %p140 = por %p138, %p139
      %p141 = scmp.ne.s32.totalorder %s132, %s133
      %p142 = scmp.eq.s32.totalorder %s19, 0
      %p143 = por %p141, %p142
      %p144 = scmp.ne.s32.totalorder %s132, %s133
      %p145 = scmp.eq.s32.totalorder %s20, 1
      %p146 = por %p144, %p145
      %p148 = scmp.ne.s32.totalorder %s133, %s147
      %p149 = scmp.eq.s32.totalorder %s20, 0
      %p150 = por %p148, %p149
      %s152 = sadd.s32 %s151, 1
      %p155 = scmp.eq.s32.totalorder %s14, 1
      %p156 = scmp.ne.s32.totalorder %s151, %s153
      %p157 = scmp.eq.s32.totalorder %s14, 0
      %p158 = por %p156, %p157
      %p159 = scmp.ne.s32.totalorder %s151, %s153
      %p160 = scmp.eq.s32.totalorder %s19, 1
      %p161 = por %p159, %p160
      %p162 = scmp.ne.s32.totalorder %s153, %s154
      %p163 = scmp.eq.s32.totalorder %s19, 0
      %p164 = por %p162, %p163
      %p165 = scmp.ne.s32.totalorder %s153, %s154
      %p166 = scmp.eq.s32.totalorder %s20, 1
      %p167 = por %p165, %p166
      %p169 = scmp.ne.s32.totalorder %s154, %s168
      %p170 = scmp.eq.s32.totalorder %s20, 0
      %p171 = por %p169, %p170
      %s172 = ssub.s32 %s21, %s33
      %s173 = ssub.s32 %s22, %s29
      %s174 = sor.u32 %s172, %s173
      %p175 = scmp.eq.s32.totalorder %s174, 0
      %s177 = sadd.s32 %s176, 1
      %s178 = scalar_select %p175, %s176, %s177
      %p181 = pneg %p175
      %p182 = scmp.eq.s32.totalorder %s14, 1
      %p183 = por %p181, %p182
      %p184 = scmp.ne.s32.totalorder %s176, %s179
      %p185 = scmp.eq.s32.totalorder %s14, 0
      %p186 = por %p184, %p185
      %p187 = scmp.ne.s32.totalorder %s176, %s179
      %p188 = scmp.eq.s32.totalorder %s19, 1
      %p189 = por %p187, %p188
      %p190 = scmp.ne.s32.totalorder %s179, %s180
      %p191 = scmp.eq.s32.totalorder %s19, 0
      %p192 = por %p190, %p191
      %p193 = scmp.ne.s32.totalorder %s179, %s180
      %p194 = scmp.eq.s32.totalorder %s20, 1
      %p195 = por %p193, %p194
      %p197 = scmp.ne.s32.totalorder %s180, %s196
      %p198 = scmp.eq.s32.totalorder %s20, 0
      %p199 = por %p197, %p198
      %p200 = scmp.le.s32.totalorder 1, %s14
      %p201 = scmp.lt.s32.totalorder %s14, 3
      %p202 = pnand %p200, %p201
      %p203 = pneg %p202
      // Predicated region
      $region9: #{conv_block.3} parent=5 // pred_check
        _
      $region10: #{conv_block.3} parent=5 // pred_check_branch
        %205 = sbr.rel (%p202) target = $region12
      $region11: #{conv_block.3} parent=5 // pred_region
        %s206 = ssub.s32 %s14, 1
        // Predicated region
        $region13: #{conv_block.3} parent=11 // pred_check
          %p207 = pneg %p143
        $region14: #{conv_block.3} parent=11 // pred_check_branch
          %209 = sbr.rel (%p207) target = $region16
        $region15: #{conv_block.3} parent=11 // pred_region
          _
        $region16: #{conv_block.3} parent=11 // pred_fallthru
          _
        // Predicated region
        $region17: #{conv_block.3} parent=11 // pred_check
          %p210 = pneg %p164
        $region18: #{conv_block.3} parent=11 // pred_check_branch
          %212 = sbr.rel (%p210) target = $region20
        $region19: #{conv_block.3} parent=11 // pred_region
          _
        $region20: #{conv_block.3} parent=11 // pred_fallthru
          _
      $region12: #{conv_block.3} parent=5 // pred_fallthru
        _
      %p213 = scmp.lt.s32.totalorder %s14, 2
      // Predicated region
      $region21: #{conv_block.3} parent=5 // pred_check
        %p214 = pneg %p213
      $region22: #{conv_block.3} parent=5 // pred_check_branch
        %216 = sbr.rel (%p214) target = $region24
      $region23: #{conv_block.3} parent=5 // pred_region
        // Predicated region
        $region25: #{conv_block.3} parent=23 // pred_check
          %p217 = pneg %p48
        $region26: #{conv_block.3} parent=23 // pred_check_branch
          %219 = sbr.rel (%p217) target = $region28
        $region27: #{conv_block.3} parent=23 // pred_region
          %p220 = scmp.lt.s32.totalorder %s21, 1
          %s221 = scalar_select %p220, %s21, 1
          %p222 = scmp.lt.s32.totalorder %s22, 0
          %s223 = scalar_select %p222, %s22, 0
          %s224 = sadd.s32 %s223, %s221
          %s225 = smul.addr %s224, 4
          %s226 = scalar_lea.vmem %s0, %s225
        $region28: #{conv_block.3} parent=23 // pred_fallthru
          _
        // Predicated region
        $region29: #{conv_block.3} parent=23 // pred_check
          %p227 = pneg %p82
        $region30: #{conv_block.3} parent=23 // pred_check_branch
          %229 = sbr.rel (%p227) target = $region32
        $region31: #{conv_block.3} parent=23 // pred_region
          %s230 = ssub.s32 %s22, 1
          %p231 = scmp.gt.s32.totalorder %s230, 0
          %s232 = scalar_select %p231, %s230, 0
          %p233 = scmp.lt.s32.totalorder %s21, 1
          %s234 = scalar_select %p233, %s21, 1
          %p235 = scmp.lt.s32.totalorder %s232, 0
          %s236 = scalar_select %p235, %s232, 0
          %s237 = sadd.s32 %s236, %s234
          %s238 = smul.addr %s237, 4
          %s239 = scalar_lea.vmem %s1, %s238
          %s240 = ssub.s32 %s22, 1
          %p241 = scmp.gt.s32.totalorder %s240, 0
          %s242 = scalar_select %p241, %s240, 0
        $region32: #{conv_block.3} parent=23 // pred_fallthru
          _
        // Predicated region
        $region33: #{conv_block.3} parent=23 // pred_check
          %p243 = pneg %p116
        $region34: #{conv_block.3} parent=23 // pred_check_branch
          %245 = sbr.rel (%p243) target = $region36
        $region35: #{conv_block.3} parent=23 // pred_region
          %s246 = sadd.s32 %s22, 1
          %p247 = scmp.lt.s32.totalorder %s246, 0
          %s248 = scalar_select %p247, %s246, 0
          %p249 = scmp.lt.s32.totalorder %s21, 1
          %s250 = scalar_select %p249, %s21, 1
          %p251 = scmp.lt.s32.totalorder %s248, 0
          %s252 = scalar_select %p251, %s248, 0
          %s253 = sadd.s32 %s252, %s250
          %s254 = smul.addr %s253, 4
          %s255 = scalar_lea.vmem %s2, %s254
          %s256 = sadd.s32 %s22, 1
          %p257 = scmp.lt.s32.totalorder %s256, 0
          %s258 = scalar_select %p257, %s256, 0
        $region36: #{conv_block.3} parent=23 // pred_fallthru
          _
      $region24: #{conv_block.3} parent=5 // pred_fallthru
        _
      %p259 = scmp.le.s32.totalorder 1, %s14
      %p260 = scmp.lt.s32.totalorder %s14, 3
      %p261 = pnand %p259, %p260
      %p262 = pneg %p261
      // Predicated region
      $region37: #{conv_block.3} parent=5 // pred_check
        _
      $region38: #{conv_block.3} parent=5 // pred_check_branch
        %264 = sbr.rel (%p261) target = $region40
      $region39: #{conv_block.3} parent=5 // pred_region
        %s265 = ssub.s32 %s14, 1
        %p266 = scmp.lt.s32.totalorder %s23, 1
        %s267 = scalar_select %p266, %s23, 1
        %p268 = scmp.lt.s32.totalorder %s24, 0
        %s269 = scalar_select %p268, %s24, 0
        %s270 = sadd.s32 %s269, %s267
        %s271 = smul.addr %s270, 4
        %s272 = scalar_lea.vmem %s0, %s271
        %p273 = pneg %p54
        %p274 = pneg %p51
        %s275 = ssub.s32 %s24, 1
        %p276 = scmp.gt.s32.totalorder %s275, 0
        %s277 = scalar_select %p276, %s275, 0
        %p278 = scmp.lt.s32.totalorder %s23, 1
        %s279 = scalar_select %p278, %s23, 1
        %p280 = scmp.lt.s32.totalorder %s277, 0
        %s281 = scalar_select %p280, %s277, 0
        %s282 = sadd.s32 %s281, %s279
        %s283 = smul.addr %s282, 4
        %s284 = scalar_lea.vmem %s1, %s283
        %p285 = pneg %p88
        %p286 = pneg %p85
        %s287 = sadd.s32 %s24, 1
        %p288 = scmp.lt.s32.totalorder %s287, 0
        %s289 = scalar_select %p288, %s287, 0
        %p290 = scmp.lt.s32.totalorder %s23, 1
        %s291 = scalar_select %p290, %s23, 1
        %p292 = scmp.lt.s32.totalorder %s289, 0
        %s293 = scalar_select %p292, %s289, 0
        %s294 = sadd.s32 %s293, %s291
        %s295 = smul.addr %s294, 4
        %s296 = scalar_lea.vmem %s2, %s295
        %p297 = pneg %p122
        %p298 = pneg %p119
        %p299 = pneg %p143
        %p300 = pneg %p140
        %p301 = pneg %p164
        %p302 = pneg %p161
        %p303 = pneg %p192
        %p304 = pneg %p189
        %s305 = sand.u32 %s179, 1
        %s306 = scalar_lea.sflag [#allocation3], %s305
        %s307 = sand.u32 %s179, 1
        %s308 = smul.addr %s307, 8
        %s309 = scalar_lea.vmem [#allocation2], %s308
        %p310 = scmp.lt.s32.totalorder %s23, 1
        %s311 = scalar_select %p310, %s23, 1
        %p312 = scmp.lt.s32.totalorder %s24, 0
        %s313 = scalar_select %p312, %s24, 0
        %s314 = sadd.s32 %s313, %s311
        %s315 = smul.addr %s314, 4
        %s316 = scalar_lea.vmem %s0, %s315
        %s317 = ssub.s32 %s24, 1
        %p318 = scmp.gt.s32.totalorder %s317, 0
        %s319 = scalar_select %p318, %s317, 0
        %p320 = scmp.lt.s32.totalorder %s23, 1
        %s321 = scalar_select %p320, %s23, 1
        %p322 = scmp.lt.s32.totalorder %s319, 0
        %s323 = scalar_select %p322, %s319, 0
        %s324 = sadd.s32 %s323, %s321
        %s325 = smul.addr %s324, 4
        %s326 = scalar_lea.vmem %s1, %s325
        %s327 = ssub.s32 %s24, 1
        %p328 = scmp.gt.s32.totalorder %s327, 0
        %s329 = scalar_select %p328, %s327, 0
        %s330 = sadd.s32 %s24, 1
        %p331 = scmp.lt.s32.totalorder %s330, 0
        %s332 = scalar_select %p331, %s330, 0
        %p333 = scmp.lt.s32.totalorder %s23, 1
        %s334 = scalar_select %p333, %s23, 1
        %p335 = scmp.lt.s32.totalorder %s332, 0
        %s336 = scalar_select %p335, %s332, 0
        %s337 = sadd.s32 %s336, %s334
        %s338 = smul.addr %s337, 4
        %s339 = scalar_lea.vmem %s2, %s338
        %s340 = sadd.s32 %s24, 1
        %p341 = scmp.lt.s32.totalorder %s340, 0
        %s342 = scalar_select %p341, %s340, 0
        %v343 = vld [vmem:[%s316] sm:$0xf]
        %v344 = vlaneseq
        %v345 = vand.u32 %v344, 127
        %p346 = scmp.eq.s32.totalorder %s24, 0
        %347 = vrot.lane.b32.xlu0 %v343, 1
        %v348 = vpop.permute.xlu0 %347
        %v349 = vld [vmem:[%s326] sm:$0xf]
        %s350 = scalar_select %p346, 1, 0
        %v351 = vstv %s350
        %vm352 = vcmp.eq.s32.totalorder %v351, 1
        %v353 = vsel %vm352, 0.0, %v349
        %vm354 = vcmp.eq.s32.totalorder %v345, 0
        %v355 = vsel %vm354, 1, 0
        %vm356 = vcmp.eq.s32.totalorder %v355, 1
        %358 = vset.pattern.permute.xlu0 127
        %359 = vperm.xlu0 %358, %v353
        %v360 = vpop.permute.xlu0 %359
        %v362 = vsel %vm356, %v360, %v348
        %v363 = vld [vmem:[%s3] sm:$0xff]
        %s364 = scalar_lea.vmem %s3, 8
        %v365 = vld [vmem:[%s364] sm:$0xff]
        %vm366 = vcmask 31744
        %v368 = vsel %vm366, %v365, 0
        %vm370 = vcmask 1043456
        %v372 = vsel %vm370, %v343, 0
        %374 = vmatprep.subr.mxu0 0.0
        %375 = vmatpush1.msra.mxu0 %v372
        %376 = vmatprep.subr.mxu0 0.0
        %377 = vmatpush1.msra.mxu0 0.0
        %378 = vmatprep.subr.mxu0 0.0
        %379 = vmatpush1.msra.mxu0 0.0
        %380 = vmatprep.subr.mxu0 0.0
        %381 = vmatpush1.msra.mxu0 0.0
        %382 = vmatprep.subr.mxu0 0.0
        %383 = vmatpush1.msra.mxu0 0.0
        %384 = vmatprep.subr.mxu0 0.0
        %385 = vmatpush1.msra.mxu0 0.0
        %386 = vmatprep.subr.mxu0 0.0
        %387 = vmatpush1.msra.mxu0 0.0
        %388 = vmatprep.subr.mxu0 0.0
        %389 = vmatpush1.msra.mxu0 0.0
        %390 = vmatprep.subr.mxu0 0.0
        %391 = vmatpush1.msra.mxu0 0.0
        %392 = vmatprep.subr.mxu0 0.0
        %393 = vmatpush1.msra.mxu0 0.0
        %394 = vmatprep.subr.mxu0 0.0
        %395 = vmatpush1.msra.mxu0 0.0
        %396 = vmatprep.subr.mxu0 0.0
        %397 = vmatpush1.msra.mxu0 0.0
        %398 = vmatprep.subr.mxu0 0.0
        %399 = vmatpush1.msra.mxu0 0.0
        %400 = vmatprep.subr.mxu0 0.0
        %401 = vmatpush1.msra.mxu0 0.0
        %402 = vmatprep.subr.mxu0 0.0
        %403 = vmatpush1.msra.mxu0 0.0
        %404 = vmatprep.subr.mxu0 0.0
        %405 = vmatpush1.msra.mxu0 0.0
        %406 = vmatprep.subr.mxu0 0.0
        %407 = vmatpush1.msra.mxu0 0.0
        %408 = vmatprep.subr.mxu0 0.0
        %409 = vmatpush1.msra.mxu0 0.0
        %410 = vmatprep.subr.mxu0 0.0
        %411 = vmatpush1.msra.mxu0 0.0
        %412 = vmatprep.subr.mxu0 0.0
        %413 = vmatpush1.msra.mxu0 0.0
        %414 = vmatprep.subr.mxu0 0.0
        %415 = vmatpush1.msra.mxu0 0.0
        %416 = vmatprep.subr.mxu0 0.0
        %417 = vmatpush1.msra.mxu0 0.0
        %418 = vmatprep.subr.mxu0 0.0
        %419 = vmatpush1.msra.mxu0 0.0
        %420 = vmatprep.subr.mxu0 0.0
        %421 = vmatpush1.msra.mxu0 0.0
        %422 = vmatprep.subr.mxu0 0.0
        %423 = vmatpush1.msra.mxu0 0.0
        %424 = vmatprep.subr.mxu0 0.0
        %425 = vmatpush1.msra.mxu0 0.0
        %426 = vmatprep.subr.mxu0 0.0
        %427 = vmatpush1.msra.mxu0 0.0
        %428 = vmatprep.subr.mxu0 0.0
        %429 = vmatpush1.msra.mxu0 0.0
        %430 = vmatprep.subr.mxu0 0.0
        %431 = vmatpush1.msra.mxu0 0.0
        %432 = vmatprep.subr.mxu0 0.0
        %433 = vmatpush1.msra.mxu0 0.0
        %434 = vmatprep.subr.mxu0 0.0
        %435 = vmatpush1.msra.mxu0 0.0
        %436 = vmatprep.subr.mxu0 0.0
        %437 = vmatpush1.msra.mxu0 0.0
        %438 = vmatprep.mubr.f32.mxu0 0.0
        %439 = vmatmul.mubr.f32.gmra.mrb[0].mxu0 %v368
        %v440 = vpop.f32.mrb[0].mxu0
        %v441 = vadd.f32 0.0, %v440
        %v442 = vpop.f32.mrb[0].mxu0
        %443 = vdwg.mxu0
        %v445 = vsel %vm366, %v363, 0
        %v448 = vsel %vm370, %v362, 0
        %450 = vmatprep.subr.mxu0 0.0
        %451 = vmatpush1.msra.mxu0 %v448
        %452 = vmatprep.subr.mxu0 0.0
        %453 = vmatpush1.msra.mxu0 0.0
        %454 = vmatprep.subr.mxu0 0.0
        %455 = vmatpush1.msra.mxu0 0.0
        %456 = vmatprep.subr.mxu0 0.0
        %457 = vmatpush1.msra.mxu0 0.0
        %458 = vmatprep.subr.mxu0 0.0
        %459 = vmatpush1.msra.mxu0 0.0
        %460 = vmatprep.subr.mxu0 0.0
        %461 = vmatpush1.msra.mxu0 0.0
        %462 = vmatprep.subr.mxu0 0.0
        %463 = vmatpush1.msra.mxu0 0.0
        %464 = vmatprep.subr.mxu0 0.0
        %465 = vmatpush1.msra.mxu0 0.0
        %466 = vmatprep.subr.mxu0 0.0
        %467 = vmatpush1.msra.mxu0 0.0
        %468 = vmatprep.subr.mxu0 0.0
        %469 = vmatpush1.msra.mxu0 0.0
        %470 = vmatprep.subr.mxu0 0.0
        %471 = vmatpush1.msra.mxu0 0.0
        %472 = vmatprep.subr.mxu0 0.0
        %473 = vmatpush1.msra.mxu0 0.0
        %474 = vmatprep.subr.mxu0 0.0
        %475 = vmatpush1.msra.mxu0 0.0
        %476 = vmatprep.subr.mxu0 0.0
        %477 = vmatpush1.msra.mxu0 0.0
        %478 = vmatprep.subr.mxu0 0.0
        %479 = vmatpush1.msra.mxu0 0.0
        %480 = vmatprep.subr.mxu0 0.0
        %481 = vmatpush1.msra.mxu0 0.0
        %482 = vmatprep.subr.mxu0 0.0
        %483 = vmatpush1.msra.mxu0 0.0
        %484 = vmatprep.subr.mxu0 0.0
        %485 = vmatpush1.msra.mxu0 0.0
        %486 = vmatprep.subr.mxu0 0.0
        %487 = vmatpush1.msra.mxu0 0.0
        %488 = vmatprep.subr.mxu0 0.0
        %489 = vmatpush1.msra.mxu0 0.0
        %490 = vmatprep.subr.mxu0 0.0
        %491 = vmatpush1.msra.mxu0 0.0
        %492 = vmatprep.subr.mxu0 0.0
        %493 = vmatpush1.msra.mxu0 0.0
        %494 = vmatprep.subr.mxu0 0.0
        %495 = vmatpush1.msra.mxu0 0.0
        %496 = vmatprep.subr.mxu0 0.0
        %497 = vmatpush1.msra.mxu0 0.0
        %498 = vmatprep.subr.mxu0 0.0
        %499 = vmatpush1.msra.mxu0 0.0
        %500 = vmatprep.subr.mxu0 0.0
        %501 = vmatpush1.msra.mxu0 0.0
        %502 = vmatprep.subr.mxu0 0.0
        %503 = vmatpush1.msra.mxu0 0.0
        %504 = vmatprep.subr.mxu0 0.0
        %505 = vmatpush1.msra.mxu0 0.0
        %506 = vmatprep.subr.mxu0 0.0
        %507 = vmatpush1.msra.mxu0 0.0
        %508 = vmatprep.subr.mxu0 0.0
        %509 = vmatpush1.msra.mxu0 0.0
        %510 = vmatprep.subr.mxu0 0.0
        %511 = vmatpush1.msra.mxu0 0.0
        %512 = vmatprep.subr.mxu0 0.0
        %513 = vmatpush1.msra.mxu0 0.0
        %514 = vmatprep.mubr.f32.mxu0 0.0
        %515 = vmatmul.mubr.f32.gmra.mrb[0].mxu0 %v445
        %v516 = vpop.f32.mrb[0].mxu0
        %v517 = vadd.f32 %v441, %v516
        %v518 = vpop.f32.mrb[0].mxu0
        %519 = vdwg.mxu0
        %520 = vrot.lane.b32.xlu0 %v343, 127
        %v521 = vpop.permute.xlu0 %520
        %v522 = vld [vmem:[%s339] sm:$0xf]
        %v523 = vsel %vm352, 0.0, %v522
        %vm524 = vcmp.eq.s32.totalorder %v345, 127
        %v525 = vsel %vm524, 1, 0
        %vm526 = vcmp.eq.s32.totalorder %v525, 1
        %528 = vset.pattern.permute.xlu0 0
        %529 = vperm.xlu0 %528, %v523
        %v530 = vpop.permute.xlu0 %529
        %v532 = vsel %vm526, %v530, %v521
        %s533 = scalar_lea.vmem %s3, 16
        %v534 = vld [vmem:[%s533] sm:$0xff]
        %v536 = vsel %vm366, %v534, 0
        %v539 = vsel %vm370, %v532, 0
        %541 = vmatprep.subr.mxu0 0.0
        %542 = vmatpush1.msra.mxu0 %v539
        %543 = vmatprep.subr.mxu0 0.0
        %544 = vmatpush1.msra.mxu0 0.0
        %545 = vmatprep.subr.mxu0 0.0
        %546 = vmatpush1.msra.mxu0 0.0
        %547 = vmatprep.subr.mxu0 0.0
        %548 = vmatpush1.msra.mxu0 0.0
        %549 = vmatprep.subr.mxu0 0.0
        %550 = vmatpush1.msra.mxu0 0.0
        %551 = vmatprep.subr.mxu0 0.0
        %552 = vmatpush1.msra.mxu0 0.0
        %553 = vmatprep.subr.mxu0 0.0
        %554 = vmatpush1.msra.mxu0 0.0
        %555 = vmatprep.subr.mxu0 0.0
        %556 = vmatpush1.msra.mxu0 0.0
        %557 = vmatprep.subr.mxu0 0.0
        %558 = vmatpush1.msra.mxu0 0.0
        %559 = vmatprep.subr.mxu0 0.0
        %560 = vmatpush1.msra.mxu0 0.0
        %561 = vmatprep.subr.mxu0 0.0
        %562 = vmatpush1.msra.mxu0 0.0
        %563 = vmatprep.subr.mxu0 0.0
        %564 = vmatpush1.msra.mxu0 0.0
        %565 = vmatprep.subr.mxu0 0.0
        %566 = vmatpush1.msra.mxu0 0.0
        %567 = vmatprep.subr.mxu0 0.0
        %568 = vmatpush1.msra.mxu0 0.0
        %569 = vmatprep.subr.mxu0 0.0
        %570 = vmatpush1.msra.mxu0 0.0
        %571 = vmatprep.subr.mxu0 0.0
        %572 = vmatpush1.msra.mxu0 0.0
        %573 = vmatprep.subr.mxu0 0.0
        %574 = vmatpush1.msra.mxu0 0.0
        %575 = vmatprep.subr.mxu0 0.0
        %576 = vmatpush1.msra.mxu0 0.0
        %577 = vmatprep.subr.mxu0 0.0
        %578 = vmatpush1.msra.mxu0 0.0
        %579 = vmatprep.subr.mxu0 0.0
        %580 = vmatpush1.msra.mxu0 0.0
        %581 = vmatprep.subr.mxu0 0.0
        %582 = vmatpush1.msra.mxu0 0.0
        %583 = vmatprep.subr.mxu0 0.0
        %584 = vmatpush1.msra.mxu0 0.0
        %585 = vmatprep.subr.mxu0 0.0
        %586 = vmatpush1.msra.mxu0 0.0
        %587 = vmatprep.subr.mxu0 0.0
        %588 = vmatpush1.msra.mxu0 0.0
        %589 = vmatprep.subr.mxu0 0.0
        %590 = vmatpush1.msra.mxu0 0.0
        %591 = vmatprep.subr.mxu0 0.0
        %592 = vmatpush1.msra.mxu0 0.0
        %593 = vmatprep.subr.mxu0 0.0
        %594 = vmatpush1.msra.mxu0 0.0
        %595 = vmatprep.subr.mxu0 0.0
        %596 = vmatpush1.msra.mxu0 0.0
        %597 = vmatprep.subr.mxu0 0.0
        %598 = vmatpush1.msra.mxu0 0.0
        %599 = vmatprep.subr.mxu0 0.0
        %600 = vmatpush1.msra.mxu0 0.0
        %601 = vmatprep.subr.mxu0 0.0
        %602 = vmatpush1.msra.mxu0 0.0
        %603 = vmatprep.subr.mxu0 0.0
        %604 = vmatpush1.msra.mxu0 0.0
        %605 = vmatprep.mubr.f32.mxu0 0.0
        %606 = vmatmul.mubr.f32.gmra.mrb[0].mxu0 %v536
        %v607 = vpop.f32.mrb[0].mxu0
        %v608 = vadd.f32 0.0, %v607
        %v609 = vpop.f32.mrb[0].mxu0
        %610 = vdwg.mxu0
        %v611 = vadd.f32 %v517, %v608
        %v612 = vld [vmem:[%s4] sm:$0xff]
        %614 = vset.pattern.permute.xlu0 0
        %615 = vperm.xlu0 %614, %v612
        %v616 = vpop.permute.xlu0 %615
        %v618 = vadd.f32 %v611, %v616
        %vm619 = vcmp.gt.f32.partialorder %v618, 0.0
        %v620 = vmul.f32 %v618, 0.2
        %v621 = vsel %vm619, %v618, %v620
        %vm622 = vcmask 130048
        %623 = vst.msk [vmem:[%s309] sm:$0xff] %vm622, %v621
        %s624 = sand.u32 %s179, 1
        %s625 = scalar_lea.sflag [#allocation3], %s624
        %s626 = sand.u32 %s179, 1
        %s627 = smul.addr %s626, 8
        %s628 = scalar_lea.vmem [#allocation2], %s627
        // Predicated region
        $region41: #{conv_block.3} parent=39 // pred_check
          %p629 = pneg %p189
        $region42: #{conv_block.3} parent=39 // pred_check_branch
          %631 = sbr.rel (%p629) target = $region44
        $region43: #{conv_block.3} parent=39 // pred_region
          %s633 = ssub.s32 128, 128
          %634 = vsyncadd %s625, %s633
          %s635 = sadd.s32 %s24, %s23
          %s636 = smul.addr %s635, 128
          %s637 = scalar_lea.hbm %s5, %s636
          %s639 = sshll.u32 %s628, 4
          %s640 = int_to_ptr.vmem [resolvable:$true] %s639
          %642 = dma.vmem_to_hbm [thread:$0]  %s640, 128, %s637, %s625
        $region44: #{conv_block.3} parent=39 // pred_fallthru
          _
      $region40: #{conv_block.3} parent=5 // pred_fallthru
        _
      %p643 = scmp.le.s32.totalorder 2, %s14
      // Predicated region
      $region45: #{conv_block.3} parent=5 // pred_check
        %p644 = pneg %p643
      $region46: #{conv_block.3} parent=5 // pred_check_branch
        %646 = sbr.rel (%p644) target = $region48
      $region47: #{conv_block.3} parent=5 // pred_region
        %s647 = ssub.s32 %s14, 2
        // Predicated region
        $region49: #{conv_block.3} parent=47 // pred_check
          %p648 = pneg %p195
        $region50: #{conv_block.3} parent=47 // pred_check_branch
          %650 = sbr.rel (%p648) target = $region52
        $region51: #{conv_block.3} parent=47 // pred_region
          %s651 = sand.u32 %s180, 1
          %s652 = scalar_lea.sflag [#allocation3], %s651
          %s653 = sand.u32 %s180, 1
          %s654 = smul.addr %s653, 8
          %s655 = scalar_lea.vmem [#allocation2], %s654
          %656 = dma.done %s652, 128
        $region52: #{conv_block.3} parent=47 // pred_fallthru
          _
      $region48: #{conv_block.3} parent=5 // pred_fallthru
        _
    $region6: #{conv_block.3} parent=1 // loop_footer
      %s18 = sadd.s32 1, %s14
    $region7: #{conv_block.3} parent=1 // loop_footer_branch
      %13 = sbr.rel target = $region3
    $region8: #{conv_block.3} parent=1 // loop_exit
      _
    %657 = vsyncpa [#allocation3], 1
    %s658 = scalar_lea.sflag [#allocation3], 1
    %659 = vsyncpa %s658, 1

</llo_original>
